<compile_context>
chip_gen: v7x
topology: tpu7x:2x2x1
jax: 0.10.0
libtpu: 0.0.40
codegen_flags: <defaults>
</compile_context>

<pallas_src>
import functools

import jax
import jax.numpy as jnp
from jax.experimental import pallas as pl
from jax.experimental.pallas import tpu as pltpu


def dense_layer_kernel(x_ref, scale_ref, shift_ref, w_ref, b_ref, o_ref,
                       u_ref, acc_ref):
    # x_ref:     (Nb, H, W, C)       f32   input tile (Nb images)
    # scale_ref: (1, C)              f32   gamma / sqrt(var + eps)
    # shift_ref: (1, C)              f32   beta - mean * scale
    # w_ref:     (3, 3*C, G)         bf16  conv weight, row-major taps (ky, kx*C+c, g)
    # b_ref:     (1, G)              f32   conv bias
    # o_ref:     (Nb, H, W, C+G)     f32   unpadded channel concat [x, conv]
    # u_ref:     (H+2, W, 3*C)       bf16  row-unfolded, zero-bordered activation:
    #                                       u[h, x, kx*C:(kx+1)*C] = a_pad[h, x+kx, :]
    # acc_ref:   (H*W, G)            f32   conv accumulator (VMEM, not vregs)
    Nb, H, W, C = x_ref.shape
    G = w_ref.shape[2]
    C3 = 3 * C
    zdt = u_ref.dtype

    # hoisted once per grid step
    scale = scale_ref[0]                                    # (C,)
    shift = shift_ref[0]                                    # (C,)
    bias_b = jnp.broadcast_to(b_ref[...], (H * W, G)).astype(jnp.float32)

    # Zero only the never-written border strips of the unfold scratch.
    # (Per-step, not pl.when(program_id == 0): with a "parallel" grid each
    # TensorCore has its own scratch and may never see step 0.)
    u_ref[pl.ds(0, 1)] = jnp.zeros((1, W, C3), zdt)                         # top row
    u_ref[pl.ds(H + 1, 1)] = jnp.zeros((1, W, C3), zdt)                     # bottom row
    u_ref[pl.ds(1, H), pl.ds(0, 1), pl.ds(0, C)] = jnp.zeros((H, 1, C), zdt)       # kx=0, x=0
    u_ref[pl.ds(1, H), pl.ds(W - 1, 1), pl.ds(2 * C, C)] = jnp.zeros((H, 1, C), zdt)  # kx=2, x=W-1

    for n in range(Nb):                                     # static, unrolled
        x = x_ref[n]                                        # (H, W, C) f32
        # folded BatchNorm + ReLU: one FMA + max on the VPU (f32 on all gens)
        a = jnp.maximum(x * scale + shift, 0.0)
        ab = a.astype(zdt)                                  # bf16 MXU operand

        # row-unfold the 3 kx taps (interior fully overwritten per image):
        #   u[h, x, kx*C:(kx+1)*C] = a_pad[h, x+kx, :]
        u_ref[pl.ds(1, H), pl.ds(0, W), pl.ds(C, C)] = ab                     # kx = 1
        u_ref[pl.ds(1, H), pl.ds(1, W - 1), pl.ds(0, C)] = ab[:, : W - 1, :]  # kx = 0
        u_ref[pl.ds(1, H), pl.ds(0, W - 1), pl.ds(2 * C, C)] = ab[:, 1:, :]   # kx = 2

        # 3x3 conv = 3 row matmuls with K = 3C; bias folded into the init,
        # accumulation in VMEM (f32), bf16 operands on the MXU.
        lhs0 = u_ref[pl.ds(0, H)].reshape(H * W, C3)
        acc_ref[...] = bias_b + jnp.dot(
            lhs0, w_ref[0], preferred_element_type=jnp.float32)
        for ky in (1, 2):
            lhs = u_ref[pl.ds(ky, H)].reshape(H * W, C3)
            acc_ref[...] += jnp.dot(
                lhs, w_ref[ky], preferred_element_type=jnp.float32)

        # channel concat [x, conv] written straight into the (C+G)-lane tile
        o_ref[n, :, :, :C] = x
        o_ref[n, :, :, C:] = acc_ref[...].reshape(H, W, G).astype(o_ref.dtype)


@functools.partial(jax.jit, static_argnames=("eps", "block_n"))
def dense_layer(x, gamma, beta, conv_w_torch, conv_b, eps=1e-5, block_n=1):
    """x: (N, H, W, C_in) float32 NHWC.
    gamma, beta: (C_in,)            BatchNorm affine params.
    conv_w_torch: (G, C_in, 3, 3)   PyTorch-layout conv weight.
    conv_b: (G,)                    conv bias.
    Returns (N, H, W, C_in + G).
    """
    N, H, W, C = x.shape
    G = conv_w_torch.shape[0]

    # --- glue: training-mode batch statistics, one fused pass over x ---
    cnt = N * H * W
    s = jnp.sum(x, axis=(0, 1, 2))
    ss = jnp.sum(jnp.square(x), axis=(0, 1, 2))
    mean = s / cnt
    var = jnp.maximum(ss / cnt - jnp.square(mean), 0.0)    # biased, matches PyTorch
    scale_v = gamma * jax.lax.rsqrt(var + eps)
    shift_v = beta - mean * scale_v
    scale = scale_v.astype(jnp.float32).reshape(1, C)
    shift = shift_v.astype(jnp.float32).reshape(1, C)

    # --- glue: conv weight -> (ky, 3C, G) bf16 (kx-major then c); bias (1, G) f32 ---
    # cross-correlation: out[y,x,g] = b[g] + sum_{ky,kx,c} a_pad[y+ky, x+kx, c] * w[g,c,ky,kx]
    w_rows = jnp.transpose(conv_w_torch, (2, 3, 1, 0)).reshape(3, 3 * C, G)
    w_rows = w_rows.astype(jnp.bfloat16)
    b = conv_b.reshape(1, G).astype(jnp.float32)

    Nb = block_n
    assert N % Nb == 0, "batch must be divisible by block_n"
    # Keep N // Nb >= 2 when possible so both v7x TensorCores get work.

    out = pl.pallas_call(
        dense_layer_kernel,
        out_shape=jax.ShapeDtypeStruct((N, H, W, C + G), x.dtype),
        grid_spec=pltpu.PrefetchScalarGridSpec(
            num_scalar_prefetch=0,
            grid=(N // Nb,),
            in_specs=[
                pl.BlockSpec((Nb, H, W, C), lambda n: (n, 0, 0, 0)),
                pl.BlockSpec((1, C), lambda n: (0, 0)),
                pl.BlockSpec((1, C), lambda n: (0, 0)),
                pl.BlockSpec((3, 3 * C, G), lambda n: (0, 0, 0)),
                pl.BlockSpec((1, G), lambda n: (0, 0)),
            ],
            out_specs=pl.BlockSpec((Nb, H, W, C + G), lambda n: (n, 0, 0, 0)),
            scratch_shapes=[
                pltpu.VMEM((H + 2, W, 3 * C), jnp.bfloat16),   # row-unfolded activation
                pltpu.VMEM((H * W, G), jnp.float32),           # conv accumulator
            ],
        ),
        compiler_params=pltpu.CompilerParams(
            dimension_semantics=("parallel",),
            vmem_limit_bytes=48 * 1024 * 1024,
        ),
    )(x, scale, shift, w_rows, b)
    return out


def _reference(x, gamma, beta, conv_w_torch, conv_b, eps=1e-5):
    # pure-JAX f32 reference (same NHWC layout)
    mean = jnp.mean(x, axis=(0, 1, 2))
    var = jnp.var(x, axis=(0, 1, 2))
    a = jnp.maximum((x - mean) * jax.lax.rsqrt(var + eps) * gamma + beta, 0.0)
    w_hwio = jnp.transpose(conv_w_torch, (2, 3, 1, 0))     # (3,3,C,G)
    conv = jax.lax.conv_general_dilated(
        a, w_hwio, window_strides=(1, 1), padding="SAME",
        dimension_numbers=("NHWC", "HWIO", "NHWC"),
    ) + conv_b
    return jnp.concatenate([x, conv], axis=-1)


if __name__ == "__main__":
    # small shapes: batch=2, in_channels=4, growth_rate=8, spatial=16
    N, H, W, C_in, growth = 2, 16, 16, 4, 8

    key = jax.random.PRNGKey(0)
    kx, kw, kb, kg, kbe = jax.random.split(key, 5)

    x = jax.random.normal(kx, (N, H, W, C_in), dtype=jnp.float32)
    gamma = 1.0 + 0.1 * jax.random.normal(kg, (C_in,), dtype=jnp.float32)
    beta = 0.1 * jax.random.normal(kbe, (C_in,), dtype=jnp.float32)
    conv_w = jax.random.normal(kw, (growth, C_in, 3, 3), dtype=jnp.float32) * 0.1
    conv_b = jax.random.normal(kb, (growth,), dtype=jnp.float32) * 0.1

    out = dense_layer(x, gamma, beta, conv_w, conv_b)
    jax.block_until_ready(out)

    ref = _reference(x, gamma, beta, conv_w, conv_b)
    assert out.shape == (N, H, W, C_in + growth), out.shape
    # bf16 matmul operands -> tolerance loosened vs the pure-f32 reference
    err = float(jnp.max(jnp.abs(out - ref)))
    assert err < 3e-2, err

    print("KERNEL_OK")
</pallas_src>

<mosaic_0001>
module attributes {stable_mosaic.version = 11 : i64} {
  func.func @dense_layer_kernel(%arg0: i32, %arg1: memref<1x16x16x4xf32, #tpu.memory_space<vmem>>, %arg2: memref<1x4xf32, #tpu.memory_space<vmem>>, %arg3: memref<1x4xf32, #tpu.memory_space<vmem>>, %arg4: memref<3x12x8xbf16, #tpu.memory_space<vmem>>, %arg5: memref<1x8xf32, #tpu.memory_space<vmem>>, %arg6: memref<1x16x16x12xf32, #tpu.memory_space<vmem>>, %arg7: memref<18x16x12xbf16, #tpu.memory_space<vmem>>, %arg8: memref<256x8xf32, #tpu.memory_space<vmem>>) attributes {dimension_semantics = [#tpu.dimension_semantics<parallel>], iteration_bounds = array<i64: 2>, scalar_prefetch = 0 : i64, scratch_operands = 2 : i64, tpu.core_type = #tpu.core_type<tc>, window_params = [{transform_indices = @transform_0, window_bounds = array<i64: 1, 16, 16, 4>}, {pipeline_mode = #tpu.pipeline_mode<synchronous>, transform_indices = @transform_1, window_bounds = array<i64: 1, 4>}, {pipeline_mode = #tpu.pipeline_mode<synchronous>, transform_indices = @transform_2, window_bounds = array<i64: 1, 4>}, {pipeline_mode = #tpu.pipeline_mode<synchronous>, transform_indices = @transform_3, window_bounds = array<i64: 3, 12, 8>}, {pipeline_mode = #tpu.pipeline_mode<synchronous>, transform_indices = @transform_4, window_bounds = array<i64: 1, 8>}, {transform_indices = @transform_5, window_bounds = array<i64: 1, 16, 16, 12>}]} {
    %c0 = arith.constant 0 : index
    %c0_0 = arith.constant 0 : index
    %0 = vector.load %arg2[%c0, %c0_0] : memref<1x4xf32, #tpu.memory_space<vmem>>, vector<1x4xf32>
    %1 = vector.shape_cast %0 : vector<1x4xf32> to vector<4xf32>
    %c0_1 = arith.constant 0 : index
    %c0_2 = arith.constant 0 : index
    %2 = vector.load %arg3[%c0_1, %c0_2] : memref<1x4xf32, #tpu.memory_space<vmem>>, vector<1x4xf32>
    %3 = vector.shape_cast %2 : vector<1x4xf32> to vector<4xf32>
    %c0_3 = arith.constant 0 : index
    %c0_4 = arith.constant 0 : index
    %4 = vector.load %arg5[%c0_3, %c0_4] : memref<1x8xf32, #tpu.memory_space<vmem>>, vector<1x8xf32>
    %5 = vector.shape_cast %4 : vector<1x8xf32> to vector<1x8xf32>
    %6 = vector.broadcast %5 : vector<1x8xf32> to vector<256x8xf32>
    %cst = arith.constant 0.000000e+00 : bf16
    %7 = vector.broadcast %cst : bf16 to vector<1x16x12xbf16>
    %c0_5 = arith.constant 0 : index
    %c0_6 = arith.constant 0 : index
    %c0_7 = arith.constant 0 : index
    %8 = vector.load %arg7[%c0_5, %c0_6, %c0_7] : memref<18x16x12xbf16, #tpu.memory_space<vmem>>, vector<1x16x12xbf16>
    tpu.vector_store %arg7[%c0_5, %c0_6, %c0_7], %7 {strides = array<i32>} : memref<18x16x12xbf16, #tpu.memory_space<vmem>>, vector<1x16x12xbf16>,
    %cst_8 = arith.constant 0.000000e+00 : bf16
    %9 = vector.broadcast %cst_8 : bf16 to vector<1x16x12xbf16>
    %c17 = arith.constant 17 : index
    %c0_9 = arith.constant 0 : index
    %c0_10 = arith.constant 0 : index
    %10 = vector.load %arg7[%c17, %c0_9, %c0_10] : memref<18x16x12xbf16, #tpu.memory_space<vmem>>, vector<1x16x12xbf16>
    tpu.vector_store %arg7[%c17, %c0_9, %c0_10], %9 {strides = array<i32>} : memref<18x16x12xbf16, #tpu.memory_space<vmem>>, vector<1x16x12xbf16>,
    %cst_11 = arith.constant 0.000000e+00 : bf16
    %11 = vector.broadcast %cst_11 : bf16 to vector<16x1x4xbf16>
    %c1 = arith.constant 1 : index
    %c0_12 = arith.constant 0 : index
    %c0_13 = arith.constant 0 : index
    %12 = vector.load %arg7[%c1, %c0_12, %c0_13] : memref<18x16x12xbf16, #tpu.memory_space<vmem>>, vector<16x1x4xbf16>
    tpu.vector_store %arg7[%c1, %c0_12, %c0_13], %11 {strides = array<i32>} : memref<18x16x12xbf16, #tpu.memory_space<vmem>>, vector<16x1x4xbf16>,
    %cst_14 = arith.constant 0.000000e+00 : bf16
    %13 = vector.broadcast %cst_14 : bf16 to vector<16x1x4xbf16>
    %c1_15 = arith.constant 1 : index
    %c15 = arith.constant 15 : index
    %c8 = arith.constant 8 : index
    %14 = vector.load %arg7[%c1_15, %c15, %c8] : memref<18x16x12xbf16, #tpu.memory_space<vmem>>, vector<16x1x4xbf16>
    tpu.vector_store %arg7[%c1_15, %c15, %c8], %13 {strides = array<i32>} : memref<18x16x12xbf16, #tpu.memory_space<vmem>>, vector<16x1x4xbf16>,
    %c0_16 = arith.constant 0 : index
    %c0_17 = arith.constant 0 : index
    %c0_18 = arith.constant 0 : index
    %c0_19 = arith.constant 0 : index
    %15 = vector.load %arg1[%c0_16, %c0_17, %c0_18, %c0_19] : memref<1x16x16x4xf32, #tpu.memory_space<vmem>>, vector<1x16x16x4xf32>
    %16 = vector.shape_cast %15 : vector<1x16x16x4xf32> to vector<16x16x4xf32>
    %17 = vector.shape_cast %1 : vector<4xf32> to vector<1x1x4xf32>
    %18 = vector.broadcast %17 : vector<1x1x4xf32> to vector<16x16x4xf32>
    %19 = arith.mulf %16, %18 : vector<16x16x4xf32>
    %20 = vector.shape_cast %3 : vector<4xf32> to vector<1x1x4xf32>
    %21 = vector.broadcast %20 : vector<1x1x4xf32> to vector<16x16x4xf32>
    %22 = arith.addf %19, %21 : vector<16x16x4xf32>
    %cst_20 = arith.constant 0.000000e+00 : f32
    %23 = vector.broadcast %cst_20 : f32 to vector<16x16x4xf32>
    %24 = arith.maximumf %22, %23 : vector<16x16x4xf32>
    %25 = arith.truncf %24 : vector<16x16x4xf32> to vector<16x16x4xbf16>
    %c1_21 = arith.constant 1 : index
    %c0_22 = arith.constant 0 : index
    %c4 = arith.constant 4 : index
    %26 = vector.load %arg7[%c1_21, %c0_22, %c4] : memref<18x16x12xbf16, #tpu.memory_space<vmem>>, vector<16x16x4xbf16>
    tpu.vector_store %arg7[%c1_21, %c0_22, %c4], %25 {strides = array<i32>} : memref<18x16x12xbf16, #tpu.memory_space<vmem>>, vector<16x16x4xbf16>,
    %27 = vector.extract_strided_slice %25 {offsets = [0, 0, 0], sizes = [16, 15, 4], strides = [1, 1, 1]} : vector<16x16x4xbf16> to vector<16x15x4xbf16>
    %c1_23 = arith.constant 1 : index
    %c1_24 = arith.constant 1 : index
    %c0_25 = arith.constant 0 : index
    %28 = vector.load %arg7[%c1_23, %c1_24, %c0_25] : memref<18x16x12xbf16, #tpu.memory_space<vmem>>, vector<16x15x4xbf16>
    tpu.vector_store %arg7[%c1_23, %c1_24, %c0_25], %27 {strides = array<i32>} : memref<18x16x12xbf16, #tpu.memory_space<vmem>>, vector<16x15x4xbf16>,
    %29 = vector.extract_strided_slice %25 {offsets = [0, 1, 0], sizes = [16, 15, 4], strides = [1, 1, 1]} : vector<16x16x4xbf16> to vector<16x15x4xbf16>
    %c1_26 = arith.constant 1 : index
    %c0_27 = arith.constant 0 : index
    %c8_28 = arith.constant 8 : index
    %30 = vector.load %arg7[%c1_26, %c0_27, %c8_28] : memref<18x16x12xbf16, #tpu.memory_space<vmem>>, vector<16x15x4xbf16>
    tpu.vector_store %arg7[%c1_26, %c0_27, %c8_28], %29 {strides = array<i32>} : memref<18x16x12xbf16, #tpu.memory_space<vmem>>, vector<16x15x4xbf16>,
    %c0_29 = arith.constant 0 : index
    %c0_30 = arith.constant 0 : index
    %c0_31 = arith.constant 0 : index
    %31 = vector.load %arg7[%c0_29, %c0_30, %c0_31] : memref<18x16x12xbf16, #tpu.memory_space<vmem>>, vector<16x16x12xbf16>
    %32 = vector.shape_cast %31 : vector<16x16x12xbf16> to vector<256x12xbf16>
    %c0_32 = arith.constant 0 : index
    %c0_33 = arith.constant 0 : index
    %c0_34 = arith.constant 0 : index
    %33 = vector.load %arg4[%c0_32, %c0_33, %c0_34] : memref<3x12x8xbf16, #tpu.memory_space<vmem>>, vector<1x12x8xbf16>
    %34 = vector.shape_cast %33 : vector<1x12x8xbf16> to vector<12x8xbf16>
    %cst_35 = arith.constant dense<0.000000e+00> : vector<256x8xf32>
    %35 = tpu.matmul %32, %34, %cst_35 {dimension_numbers = #tpu.dot_dimension_numbers<[1], [0], [0], [1], [0, 0, 1, 1], [], []>} : vector<256x12xbf16>, vector<12x8xbf16>, vector<256x8xf32> -> vector<256x8xf32>
    %36 = arith.addf %6, %35 : vector<256x8xf32>
    %c0_36 = arith.constant 0 : index
    %c0_37 = arith.constant 0 : index
    %37 = vector.load %arg8[%c0_36, %c0_37] : memref<256x8xf32, #tpu.memory_space<vmem>>, vector<256x8xf32>
    tpu.vector_store %arg8[%c0_36, %c0_37], %36 {strides = array<i32>} : memref<256x8xf32, #tpu.memory_space<vmem>>, vector<256x8xf32>,
    %c1_38 = arith.constant 1 : index
    %c0_39 = arith.constant 0 : index
    %c0_40 = arith.constant 0 : index
    %38 = vector.load %arg7[%c1_38, %c0_39, %c0_40] : memref<18x16x12xbf16, #tpu.memory_space<vmem>>, vector<16x16x12xbf16>
    %39 = vector.shape_cast %38 : vector<16x16x12xbf16> to vector<256x12xbf16>
    %c0_41 = arith.constant 0 : index
    %c0_42 = arith.constant 0 : index
    %40 = vector.load %arg8[%c0_41, %c0_42] : memref<256x8xf32, #tpu.memory_space<vmem>>, vector<256x8xf32>
    %c1_43 = arith.constant 1 : index
    %c0_44 = arith.constant 0 : index
    %c0_45 = arith.constant 0 : index
    %41 = vector.load %arg4[%c1_43, %c0_44, %c0_45] : memref<3x12x8xbf16, #tpu.memory_space<vmem>>, vector<1x12x8xbf16>
    %42 = vector.shape_cast %41 : vector<1x12x8xbf16> to vector<12x8xbf16>
    %cst_46 = arith.constant dense<0.000000e+00> : vector<256x8xf32>
    %43 = tpu.matmul %39, %42, %cst_46 {dimension_numbers = #tpu.dot_dimension_numbers<[1], [0], [0], [1], [0, 0, 1, 1], [], []>} : vector<256x12xbf16>, vector<12x8xbf16>, vector<256x8xf32> -> vector<256x8xf32>
    %44 = arith.addf %40, %43 : vector<256x8xf32>
    %c0_47 = arith.constant 0 : index
    %c0_48 = arith.constant 0 : index
    %45 = vector.load %arg8[%c0_47, %c0_48] : memref<256x8xf32, #tpu.memory_space<vmem>>, vector<256x8xf32>
    tpu.vector_store %arg8[%c0_47, %c0_48], %44 {strides = array<i32>} : memref<256x8xf32, #tpu.memory_space<vmem>>, vector<256x8xf32>,
    %c2 = arith.constant 2 : index
    %c0_49 = arith.constant 0 : index
    %c0_50 = arith.constant 0 : index
    %46 = vector.load %arg7[%c2, %c0_49, %c0_50] : memref<18x16x12xbf16, #tpu.memory_space<vmem>>, vector<16x16x12xbf16>
    %47 = vector.shape_cast %46 : vector<16x16x12xbf16> to vector<256x12xbf16>
    %c0_51 = arith.constant 0 : index
    %c0_52 = arith.constant 0 : index
    %48 = vector.load %arg8[%c0_51, %c0_52] : memref<256x8xf32, #tpu.memory_space<vmem>>, vector<256x8xf32>
    %c2_53 = arith.constant 2 : index
    %c0_54 = arith.constant 0 : index
    %c0_55 = arith.constant 0 : index
    %49 = vector.load %arg4[%c2_53, %c0_54, %c0_55] : memref<3x12x8xbf16, #tpu.memory_space<vmem>>, vector<1x12x8xbf16>
    %50 = vector.shape_cast %49 : vector<1x12x8xbf16> to vector<12x8xbf16>
    %cst_56 = arith.constant dense<0.000000e+00> : vector<256x8xf32>
    %51 = tpu.matmul %47, %50, %cst_56 {dimension_numbers = #tpu.dot_dimension_numbers<[1], [0], [0], [1], [0, 0, 1, 1], [], []>} : vector<256x12xbf16>, vector<12x8xbf16>, vector<256x8xf32> -> vector<256x8xf32>
    %52 = arith.addf %48, %51 : vector<256x8xf32>
    %c0_57 = arith.constant 0 : index
    %c0_58 = arith.constant 0 : index
    %53 = vector.load %arg8[%c0_57, %c0_58] : memref<256x8xf32, #tpu.memory_space<vmem>>, vector<256x8xf32>
    tpu.vector_store %arg8[%c0_57, %c0_58], %52 {strides = array<i32>} : memref<256x8xf32, #tpu.memory_space<vmem>>, vector<256x8xf32>,
    %c0_59 = arith.constant 0 : index
    %c0_60 = arith.constant 0 : index
    %c0_61 = arith.constant 0 : index
    %c0_62 = arith.constant 0 : index
    %54 = vector.load %arg6[%c0_59, %c0_60, %c0_61, %c0_62] : memref<1x16x16x12xf32, #tpu.memory_space<vmem>>, vector<1x16x16x4xf32>
    %55 = vector.shape_cast %54 : vector<1x16x16x4xf32> to vector<16x16x4xf32>
    %56 = vector.shape_cast %16 : vector<16x16x4xf32> to vector<1x16x16x4xf32>
    tpu.vector_store %arg6[%c0_59, %c0_60, %c0_61, %c0_62], %56 {strides = array<i32>} : memref<1x16x16x12xf32, #tpu.memory_space<vmem>>, vector<1x16x16x4xf32>,
    %c0_63 = arith.constant 0 : index
    %c0_64 = arith.constant 0 : index
    %57 = vector.load %arg8[%c0_63, %c0_64] : memref<256x8xf32, #tpu.memory_space<vmem>>, vector<256x8xf32>
    %58 = vector.shape_cast %57 : vector<256x8xf32> to vector<16x16x8xf32>
    %c0_65 = arith.constant 0 : index
    %c0_66 = arith.constant 0 : index
    %c0_67 = arith.constant 0 : index
    %c4_68 = arith.constant 4 : index
    %59 = vector.load %arg6[%c0_65, %c0_66, %c0_67, %c4_68] : memref<1x16x16x12xf32, #tpu.memory_space<vmem>>, vector<1x16x16x8xf32>
    %60 = vector.shape_cast %59 : vector<1x16x16x8xf32> to vector<16x16x8xf32>
    %61 = vector.shape_cast %58 : vector<16x16x8xf32> to vector<1x16x16x8xf32>
    tpu.vector_store %arg6[%c0_65, %c0_66, %c0_67, %c4_68], %61 {strides = array<i32>} : memref<1x16x16x12xf32, #tpu.memory_space<vmem>>, vector<1x16x16x8xf32>,
    return
  }
  func.func @transform_0(%arg0: i32) -> (i32, i32, i32, i32) {
    %c0_i32 = arith.constant 0 : i32
    %c0_i32_0 = arith.constant 0 : i32
    %c0_i32_1 = arith.constant 0 : i32
    %c0_i32_2 = arith.constant 0 : i32
    return %arg0, %c0_i32, %c0_i32_0, %c0_i32_1 : i32, i32, i32, i32
  }
  func.func @transform_1(%arg0: i32) -> (i32, i32) {
    %c0_i32 = arith.constant 0 : i32
    %c0_i32_0 = arith.constant 0 : i32
    %c0_i32_1 = arith.constant 0 : i32
    return %c0_i32, %c0_i32_0 : i32, i32
  }
  func.func @transform_2(%arg0: i32) -> (i32, i32) {
    %c0_i32 = arith.constant 0 : i32
    %c0_i32_0 = arith.constant 0 : i32
    %c0_i32_1 = arith.constant 0 : i32
    return %c0_i32, %c0_i32_0 : i32, i32
  }
  func.func @transform_3(%arg0: i32) -> (i32, i32, i32) {
    %c0_i32 = arith.constant 0 : i32
    %c0_i32_0 = arith.constant 0 : i32
    %c0_i32_1 = arith.constant 0 : i32
    %c0_i32_2 = arith.constant 0 : i32
    return %c0_i32, %c0_i32_0, %c0_i32_1 : i32, i32, i32
  }
  func.func @transform_4(%arg0: i32) -> (i32, i32) {
    %c0_i32 = arith.constant 0 : i32
    %c0_i32_0 = arith.constant 0 : i32
    %c0_i32_1 = arith.constant 0 : i32
    return %c0_i32, %c0_i32_0 : i32, i32
  }
  func.func @transform_5(%arg0: i32) -> (i32, i32, i32, i32) {
    %c0_i32 = arith.constant 0 : i32
    %c0_i32_0 = arith.constant 0 : i32
    %c0_i32_1 = arith.constant 0 : i32
    %c0_i32_2 = arith.constant 0 : i32
    return %arg0, %c0_i32, %c0_i32_0, %c0_i32_1 : i32, i32, i32, i32
  }
}

</mosaic_0001>

<llo_original>
// kernel: dense_layer.1
$region0: #{dense_layer.1}
  #allocation0 [shape = 'u32[]', space=smem, size = 0x4, offset = 0x4, fixed_abs, tag = 'smem constant byte address 0x4 - core index']
  #allocation1 [shape = 'u32[144,128]{1,0:T(1,128)}', space=vmem, size = 0x12000, scoped, tag = 'internal scratch']
  #allocation2 [shape = 'bf16[18,16,12]{2,1,0:T(16,128)(2,1)}', space=vmem, size = 0x12000, scoped, tag = 'scratch operand']
  #allocation3 [shape = 'f32[256,8]{1,0:T(8,128)}', space=vmem, size = 0x20000, scoped, tag = 'scratch operand']
  %s0 = inlined_call_operand.vmem [shape: f32[2,16,16,4], index: 0, kind: input, shape index: {}]
  %s1 = inlined_call_operand.vmem [shape: f32[1,4], index: 1, kind: input, shape index: {}]
  %s2 = inlined_call_operand.vmem [shape: f32[1,4], index: 2, kind: input, shape index: {}]
  %s3 = inlined_call_operand.vmem [shape: bf16[3,12,8], index: 3, kind: input, shape index: {}]
  %s4 = inlined_call_operand.vmem [shape: f32[1,8], index: 4, kind: input, shape index: {}]
  %s5 = inlined_call_operand.vmem [shape: f32[2,16,16,12], index: 5, kind: output, shape index: {}]
  %s6 = sld [smem:[#allocation0]]
  $region53: #{dense_layer.1} parent=0
    _
  %s8 = ssub.s32 1, %s6
  %s9 = scalar_select 0, %s8, %s6
  loop: start=0, step=1, limit=4
  $region2: #{dense_layer.1} parent=0 // loop_pre_header
    _
  $region3: #{dense_layer.1} parent=0 // loop_header
    %s11 = sphi 0, %s15
    %p12 = scmp.ge.s32.totalorder %s11, 4
    %s21 = sphi 0, %s23
    %s24 = sphi 0, %s21
    %s25 = sphi 0, %s24
    %s41 = sphi 0, %s25
    %s45 = sphi 0, %s45
    %s47 = sphi 0, %s45
    %s48 = sphi 0, %s47
    %s62 = sphi 0, %s48
    %s66 = sphi 0, %s66
    %s68 = sphi 0, %s66
    %s69 = sphi 0, %s68
    %s83 = sphi 0, %s69
    %s87 = sphi 0, %s87
    %s89 = sphi 0, %s87
    %s90 = sphi 0, %s89
    %s104 = sphi 0, %s90
    %s108 = sphi 0, %s108
    %s110 = sphi 0, %s108
    %s111 = sphi 0, %s110
    %s125 = sphi 0, %s111
    %s131 = sphi 0, %s133
    %s134 = sphi 0, %s131
    %s135 = sphi 0, %s134
    %s151 = sphi 0, %s135
  $region4: #{dense_layer.1} parent=0 // loop_header_branch
    %14 = sbr.rel (%p12) target = $region8
  $region5: #{dense_layer.1} parent=0 // loop_body
    %s16 = ssub.s32 %s11, 1
    %s17 = ssub.s32 %s11, 2
    %s18 = sadd.s32 %s11, 1
    %s19 = ssub.s32 %s11, %s18
    %p20 = scmp.eq.s32.totalorder %s19, 0
    %s22 = sadd.s32 %s21, 1
    %s23 = scalar_select %p20, %s21, %s22
    %p26 = pneg %p20
    %p27 = scmp.eq.s32.totalorder %s11, 1
    %p28 = por %p26, %p27
    %p29 = scmp.ne.s32.totalorder %s21, %s24
    %p30 = scmp.eq.s32.totalorder %s11, 0
    %p31 = por %p29, %p30
    %p32 = scmp.ne.s32.totalorder %s21, %s24
    %p33 = scmp.eq.s32.totalorder %s16, 1
    %p34 = por %p32, %p33
    %p35 = scmp.ne.s32.totalorder %s24, %s25
    %p36 = scmp.eq.s32.totalorder %s16, 0
    %p37 = por %p35, %p36
    %p38 = scmp.ne.s32.totalorder %s24, %s25
    %p39 = scmp.eq.s32.totalorder %s17, 1
    %p40 = por %p38, %p39
    %p42 = scmp.ne.s32.totalorder %s25, %s41
    %p43 = scmp.eq.s32.totalorder %s17, 0
    %p44 = por %p42, %p43
    %s46 = sadd.s32 %s45, 1
    %p49 = scmp.eq.s32.totalorder %s11, 1
    %p50 = scmp.ne.s32.totalorder %s45, %s47
    %p51 = scmp.eq.s32.totalorder %s11, 0
    %p52 = por %p50, %p51
    %p53 = scmp.ne.s32.totalorder %s45, %s47
    %p54 = scmp.eq.s32.totalorder %s16, 1
    %p55 = por %p53, %p54
    %p56 = scmp.ne.s32.totalorder %s47, %s48
    %p57 = scmp.eq.s32.totalorder %s16, 0
    %p58 = por %p56, %p57
    %p59 = scmp.ne.s32.totalorder %s47, %s48
    %p60 = scmp.eq.s32.totalorder %s17, 1
    %p61 = por %p59, %p60
    %p63 = scmp.ne.s32.totalorder %s48, %s62
    %p64 = scmp.eq.s32.totalorder %s17, 0
    %p65 = por %p63, %p64
    %s67 = sadd.s32 %s66, 1
    %p70 = scmp.eq.s32.totalorder %s11, 1
    %p71 = scmp.ne.s32.totalorder %s66, %s68
    %p72 = scmp.eq.s32.totalorder %s11, 0
    %p73 = por %p71, %p72
    %p74 = scmp.ne.s32.totalorder %s66, %s68
    %p75 = scmp.eq.s32.totalorder %s16, 1
    %p76 = por %p74, %p75
    %p77 = scmp.ne.s32.totalorder %s68, %s69
    %p78 = scmp.eq.s32.totalorder %s16, 0
    %p79 = por %p77, %p78
    %p80 = scmp.ne.s32.totalorder %s68, %s69
    %p81 = scmp.eq.s32.totalorder %s17, 1
    %p82 = por %p80, %p81
    %p84 = scmp.ne.s32.totalorder %s69, %s83
    %p85 = scmp.eq.s32.totalorder %s17, 0
    %p86 = por %p84, %p85
    %s88 = sadd.s32 %s87, 1
    %p91 = scmp.eq.s32.totalorder %s11, 1
    %p92 = scmp.ne.s32.totalorder %s87, %s89
    %p93 = scmp.eq.s32.totalorder %s11, 0
    %p94 = por %p92, %p93
    %p95 = scmp.ne.s32.totalorder %s87, %s89
    %p96 = scmp.eq.s32.totalorder %s16, 1
    %p97 = por %p95, %p96
    %p98 = scmp.ne.s32.totalorder %s89, %s90
    %p99 = scmp.eq.s32.totalorder %s16, 0
    %p100 = por %p98, %p99
    %p101 = scmp.ne.s32.totalorder %s89, %s90
    %p102 = scmp.eq.s32.totalorder %s17, 1
    %p103 = por %p101, %p102
    %p105 = scmp.ne.s32.totalorder %s90, %s104
    %p106 = scmp.eq.s32.totalorder %s17, 0
    %p107 = por %p105, %p106
    %s109 = sadd.s32 %s108, 1
    %p112 = scmp.eq.s32.totalorder %s11, 1
    %p113 = scmp.ne.s32.totalorder %s108, %s110
    %p114 = scmp.eq.s32.totalorder %s11, 0
    %p115 = por %p113, %p114
    %p116 = scmp.ne.s32.totalorder %s108, %s110
    %p117 = scmp.eq.s32.totalorder %s16, 1
    %p118 = por %p116, %p117
    %p119 = scmp.ne.s32.totalorder %s110, %s111
    %p120 = scmp.eq.s32.totalorder %s16, 0
    %p121 = por %p119, %p120
    %p122 = scmp.ne.s32.totalorder %s110, %s111
    %p123 = scmp.eq.s32.totalorder %s17, 1
    %p124 = por %p122, %p123
    %p126 = scmp.ne.s32.totalorder %s111, %s125
    %p127 = scmp.eq.s32.totalorder %s17, 0
    %p128 = por %p126, %p127
    %s129 = ssub.s32 %s11, %s18
    %p130 = scmp.eq.s32.totalorder %s129, 0
    %s132 = sadd.s32 %s131, 1
    %s133 = scalar_select %p130, %s131, %s132
    %p136 = pneg %p130
    %p137 = scmp.eq.s32.totalorder %s11, 1
    %p138 = por %p136, %p137
    %p139 = scmp.ne.s32.totalorder %s131, %s134
    %p140 = scmp.eq.s32.totalorder %s11, 0
    %p141 = por %p139, %p140
    %p142 = scmp.ne.s32.totalorder %s131, %s134
    %p143 = scmp.eq.s32.totalorder %s16, 1
    %p144 = por %p142, %p143
    %p145 = scmp.ne.s32.totalorder %s134, %s135
    %p146 = scmp.eq.s32.totalorder %s16, 0
    %p147 = por %p145, %p146
    %p148 = scmp.ne.s32.totalorder %s134, %s135
    %p149 = scmp.eq.s32.totalorder %s17, 1
    %p150 = por %p148, %p149
    %p152 = scmp.ne.s32.totalorder %s135, %s151
    %p153 = scmp.eq.s32.totalorder %s17, 0
    %p154 = por %p152, %p153
    %p155 = scmp.le.s32.totalorder 1, %s11
    %p156 = scmp.lt.s32.totalorder %s11, 3
    %p157 = pnand %p155, %p156
    %p158 = pneg %p157
    // Predicated region
    $region9: #{dense_layer.1} parent=5 // pred_check
      _
    $region10: #{dense_layer.1} parent=5 // pred_check_branch
      %160 = sbr.rel (%p157) target = $region12
    $region11: #{dense_layer.1} parent=5 // pred_region
      %s161 = ssub.s32 %s11, 1
      // Predicated region
      $region13: #{dense_layer.1} parent=11 // pred_check
        %p162 = pneg %p58
      $region14: #{dense_layer.1} parent=11 // pred_check_branch
        %164 = sbr.rel (%p162) target = $region16
      $region15: #{dense_layer.1} parent=11 // pred_region
        _
      $region16: #{dense_layer.1} parent=11 // pred_fallthru
        _
      // Predicated region
      $region17: #{dense_layer.1} parent=11 // pred_check
        %p165 = pneg %p79
      $region18: #{dense_layer.1} parent=11 // pred_check_branch
        %167 = sbr.rel (%p165) target = $region20
      $region19: #{dense_layer.1} parent=11 // pred_region
        _
      $region20: #{dense_layer.1} parent=11 // pred_fallthru
        _
      // Predicated region
      $region21: #{dense_layer.1} parent=11 // pred_check
        %p168 = pneg %p100
      $region22: #{dense_layer.1} parent=11 // pred_check_branch
        %170 = sbr.rel (%p168) target = $region24
      $region23: #{dense_layer.1} parent=11 // pred_region
        _
      $region24: #{dense_layer.1} parent=11 // pred_fallthru
        _
      // Predicated region
      $region25: #{dense_layer.1} parent=11 // pred_check
        %p171 = pneg %p121
      $region26: #{dense_layer.1} parent=11 // pred_check_branch
        %173 = sbr.rel (%p171) target = $region28
      $region27: #{dense_layer.1} parent=11 // pred_region
        _
      $region28: #{dense_layer.1} parent=11 // pred_fallthru
        _
    $region12: #{dense_layer.1} parent=5 // pred_fallthru
      _
    %p174 = scmp.lt.s32.totalorder %s11, 2
    // Predicated region
    $region29: #{dense_layer.1} parent=5 // pred_check
      %p175 = pneg %p174
    $region30: #{dense_layer.1} parent=5 // pred_check_branch
      %177 = sbr.rel (%p175) target = $region32
    $region31: #{dense_layer.1} parent=5 // pred_region
      // Predicated region
      $region33: #{dense_layer.1} parent=31 // pred_check
        %p178 = pneg %p31
      $region34: #{dense_layer.1} parent=31 // pred_check_branch
        %180 = sbr.rel (%p178) target = $region36
      $region35: #{dense_layer.1} parent=31 // pred_region
        %p181 = scmp.lt.s32.totalorder %s11, 1
        %s182 = scalar_select %p181, %s11, 1
        %s183 = smul.addr %s182, 32
        %s184 = smul.addr %s183, 8
        %s185 = scalar_lea.vmem %s0, %s184
      $region36: #{dense_layer.1} parent=31 // pred_fallthru
        _
    $region32: #{dense_layer.1} parent=5 // pred_fallthru
      _
    %p186 = scmp.le.s32.totalorder 1, %s11
    %p187 = scmp.lt.s32.totalorder %s11, 3
    %p188 = pnand %p186, %p187
    %p189 = pneg %p188
    // Predicated region
    $region37: #{dense_layer.1} parent=5 // pred_check
      _
    $region38: #{dense_layer.1} parent=5 // pred_check_branch
      %191 = sbr.rel (%p188) target = $region40
    $region39: #{dense_layer.1} parent=5 // pred_region
      %s192 = ssub.s32 %s11, 1
      %p193 = scmp.lt.s32.totalorder %s16, 1
      %s194 = scalar_select %p193, %s16, 1
      %s195 = smul.addr %s194, 32
      %s196 = smul.addr %s195, 8
      %s197 = scalar_lea.vmem %s0, %s196
      %p198 = pneg %p37
      %p199 = pneg %p34
      %p200 = pneg %p58
      %p201 = pneg %p55
      %p202 = pneg %p79
      %p203 = pneg %p76
      %p204 = pneg %p100
      %p205 = pneg %p97
      %p206 = pneg %p121
      %p207 = pneg %p118
      %p208 = pneg %p147
      %p209 = pneg %p144
      %p210 = scmp.lt.s32.totalorder %s16, 1
      %s211 = scalar_select %p210, %s16, 1
      %s212 = smul.addr %s211, 32
      %s213 = smul.addr %s212, 8
      %s214 = scalar_lea.vmem %s5, %s213
      %p215 = scmp.lt.s32.totalorder %s16, 1
      %s216 = scalar_select %p215, %s16, 1
      %s217 = smul.addr %s216, 32
      %s218 = smul.addr %s217, 8
      %s219 = scalar_lea.vmem %s0, %s218
      %p220 = scmp.lt.s32.totalorder %s16, 1
      %s221 = scalar_select %p220, %s16, 1
      %s222 = smul.addr %s221, 32
      %s223 = smul.addr %s222, 8
      %s224 = scalar_lea.vmem %s5, %s223
      %v226 = vld [vmem:[%s1] sm:$0x1]
      %v227 = vld [vmem:[%s2] sm:$0x1]
      %v228 = vld [vmem:[%s4] sm:$0x1]
      %v230 = vlaneseq
      %v231 = vshrl.u32 %v230, 7
      %v232 = vsub.s32 0, %v231
      %v233 = vrot.slane %v228, %v232
      %vm235 = vcmask 97280
      %236 = vst.msk [vmem:[#allocation2] sm:$0xff] %vm235, 0
      %s237 = scalar_lea.vmem [#allocation2], 136
      %238 = vst.msk [vmem:[%s237] sm:$0xff] %vm235, 0
      %s239 = scalar_lea.vmem [#allocation2], 8
      %vm240 = vcmask 24576
      %vm241 = vsmask.f32 256
      %vm242 = vmand %vm240, %vm241
      %v243 = vld [vmem:[%s239] sm:$0x1]
      %v244 = vsel %vm242, 0, %v243
      %245 = vst [vmem:[%s239] sm:$0x1] %v244
      %v246 = vld [vmem:[%s239 + $0x8] sm:$0x1]
      %v247 = vsel %vm242, 0, %v246
      %248 = vst [vmem:[%s239 + $0x8] sm:$0x1] %v247
      %v249 = vld [vmem:[%s239 + $0x10] sm:$0x1]
      %v250 = vsel %vm242, 0, %v249
      %251 = vst [vmem:[%s239 + $0x10] sm:$0x1] %v250
      %v252 = vld [vmem:[%s239 + $0x18] sm:$0x1]
      %v253 = vsel %vm242, 0, %v252
      %254 = vst [vmem:[%s239 + $0x18] sm:$0x1] %v253
      %v255 = vld [vmem:[%s239 + $0x20] sm:$0x1]
      %v256 = vsel %vm242, 0, %v255
      %257 = vst [vmem:[%s239 + $0x20] sm:$0x1] %v256
      %v258 = vld [vmem:[%s239 + $0x28] sm:$0x1]
      %v259 = vsel %vm242, 0, %v258
      %260 = vst [vmem:[%s239 + $0x28] sm:$0x1] %v259
      %v261 = vld [vmem:[%s239 + $0x30] sm:$0x1]
      %v262 = vsel %vm242, 0, %v261
      %263 = vst [vmem:[%s239 + $0x30] sm:$0x1] %v262
      %v264 = vld [vmem:[%s239 + $0x38] sm:$0x1]
      %v265 = vsel %vm242, 0, %v264
      %266 = vst [vmem:[%s239 + $0x38] sm:$0x1] %v265
      %v267 = vld [vmem:[%s239 + $0x40] sm:$0x1]
      %v268 = vsel %vm242, 0, %v267
      %269 = vst [vmem:[%s239 + $0x40] sm:$0x1] %v268
      %v270 = vld [vmem:[%s239 + $0x48] sm:$0x1]
      %v271 = vsel %vm242, 0, %v270
      %272 = vst [vmem:[%s239 + $0x48] sm:$0x1] %v271
      %v273 = vld [vmem:[%s239 + $0x50] sm:$0x1]
      %v274 = vsel %vm242, 0, %v273
      %275 = vst [vmem:[%s239 + $0x50] sm:$0x1] %v274
      %v276 = vld [vmem:[%s239 + $0x58] sm:$0x1]
      %v277 = vsel %vm242, 0, %v276
      %278 = vst [vmem:[%s239 + $0x58] sm:$0x1] %v277
      %v279 = vld [vmem:[%s239 + $0x60] sm:$0x1]
      %v280 = vsel %vm242, 0, %v279
      %281 = vst [vmem:[%s239 + $0x60] sm:$0x1] %v280
      %v282 = vld [vmem:[%s239 + $0x68] sm:$0x1]
      %v283 = vsel %vm242, 0, %v282
      %284 = vst [vmem:[%s239 + $0x68] sm:$0x1] %v283
      %v285 = vld [vmem:[%s239 + $0x70] sm:$0x1]
      %v286 = vsel %vm242, 0, %v285
      %287 = vst [vmem:[%s239 + $0x70] sm:$0x1] %v286
      %v288 = vld [vmem:[%s239 + $0x78] sm:$0x1]
      %v289 = vsel %vm242, 0, %v288
      %290 = vst [vmem:[%s239 + $0x78] sm:$0x1] %v289
      %vm291 = vcmask 97351
      %vm292 = vsmask.f32 7966
      %vm293 = vmand %vm291, %vm292
      %v294 = vld [vmem:[%s239] sm:$0x80]
      %v295 = vsel %vm293, 0, %v294
      %296 = vst [vmem:[%s239] sm:$0x80] %v295
      %v297 = vld [vmem:[%s239 + $0x8] sm:$0x80]
      %v298 = vsel %vm293, 0, %v297
      %299 = vst [vmem:[%s239 + $0x8] sm:$0x80] %v298
      %v300 = vld [vmem:[%s239 + $0x10] sm:$0x80]
      %v301 = vsel %vm293, 0, %v300
      %302 = vst [vmem:[%s239 + $0x10] sm:$0x80] %v301
      %v303 = vld [vmem:[%s239 + $0x18] sm:$0x80]
      %v304 = vsel %vm293, 0, %v303
      %305 = vst [vmem:[%s239 + $0x18] sm:$0x80] %v304
      %v306 = vld [vmem:[%s239 + $0x20] sm:$0x80]
      %v307 = vsel %vm293, 0, %v306
      %308 = vst [vmem:[%s239 + $0x20] sm:$0x80] %v307
      %v309 = vld [vmem:[%s239 + $0x28] sm:$0x80]
      %v310 = vsel %vm293, 0, %v309
      %311 = vst [vmem:[%s239 + $0x28] sm:$0x80] %v310
      %v312 = vld [vmem:[%s239 + $0x30] sm:$0x80]
      %v313 = vsel %vm293, 0, %v312
      %314 = vst [vmem:[%s239 + $0x30] sm:$0x80] %v313
      %v315 = vld [vmem:[%s239 + $0x38] sm:$0x80]
      %v316 = vsel %vm293, 0, %v315
      %317 = vst [vmem:[%s239 + $0x38] sm:$0x80] %v316
      %v318 = vld [vmem:[%s239 + $0x40] sm:$0x80]
      %v319 = vsel %vm293, 0, %v318
      %320 = vst [vmem:[%s239 + $0x40] sm:$0x80] %v319
      %v321 = vld [vmem:[%s239 + $0x48] sm:$0x80]
      %v322 = vsel %vm293, 0, %v321
      %323 = vst [vmem:[%s239 + $0x48] sm:$0x80] %v322
      %v324 = vld [vmem:[%s239 + $0x50] sm:$0x80]
      %v325 = vsel %vm293, 0, %v324
      %326 = vst [vmem:[%s239 + $0x50] sm:$0x80] %v325
      %v327 = vld [vmem:[%s239 + $0x58] sm:$0x80]
      %v328 = vsel %vm293, 0, %v327
      %329 = vst [vmem:[%s239 + $0x58] sm:$0x80] %v328
      %v330 = vld [vmem:[%s239 + $0x60] sm:$0x80]
      %v331 = vsel %vm293, 0, %v330
      %332 = vst [vmem:[%s239 + $0x60] sm:$0x80] %v331
      %v333 = vld [vmem:[%s239 + $0x68] sm:$0x80]
      %v334 = vsel %vm293, 0, %v333
      %335 = vst [vmem:[%s239 + $0x68] sm:$0x80] %v334
      %v336 = vld [vmem:[%s239 + $0x70] sm:$0x80]
      %v337 = vsel %vm293, 0, %v336
      %338 = vst [vmem:[%s239 + $0x70] sm:$0x80] %v337
      %v339 = vld [vmem:[%s239 + $0x78] sm:$0x80]
      %v340 = vsel %vm293, 0, %v339
      %341 = vst [vmem:[%s239 + $0x78] sm:$0x80] %v340
      %v342 = vld [vmem:[%s219] sm:$0xff]
      %v343 = vld [vmem:[%s219 + $0x8] sm:$0xff]
      %v344 = vld [vmem:[%s219 + $0x10] sm:$0xff]
      %v345 = vld [vmem:[%s219 + $0x18] sm:$0xff]
      %v346 = vld [vmem:[%s219 + $0x20] sm:$0xff]
      %v347 = vld [vmem:[%s219 + $0x28] sm:$0xff]
      %v348 = vld [vmem:[%s219 + $0x30] sm:$0xff]
      %v349 = vld [vmem:[%s219 + $0x38] sm:$0xff]
      %v350 = vld [vmem:[%s219 + $0x40] sm:$0xff]
      %v351 = vld [vmem:[%s219 + $0x48] sm:$0xff]
      %v352 = vld [vmem:[%s219 + $0x50] sm:$0xff]
      %v353 = vld [vmem:[%s219 + $0x58] sm:$0xff]
      %v354 = vld [vmem:[%s219 + $0x60] sm:$0xff]
      %v355 = vld [vmem:[%s219 + $0x68] sm:$0xff]
      %v356 = vld [vmem:[%s219 + $0x70] sm:$0xff]
      %v357 = vld [vmem:[%s219 + $0x78] sm:$0xff]
      %v358 = vld [vmem:[%s219 + $0x80] sm:$0xff]
      %v359 = vld [vmem:[%s219 + $0x88] sm:$0xff]
      %v360 = vld [vmem:[%s219 + $0x90] sm:$0xff]
      %v361 = vld [vmem:[%s219 + $0x98] sm:$0xff]
      %v362 = vld [vmem:[%s219 + $0xa0] sm:$0xff]
      %v363 = vld [vmem:[%s219 + $0xa8] sm:$0xff]
      %v364 = vld [vmem:[%s219 + $0xb0] sm:$0xff]
      %v365 = vld [vmem:[%s219 + $0xb8] sm:$0xff]
      %v366 = vld [vmem:[%s219 + $0xc0] sm:$0xff]
      %v367 = vld [vmem:[%s219 + $0xc8] sm:$0xff]
      %v368 = vld [vmem:[%s219 + $0xd0] sm:$0xff]
      %v369 = vld [vmem:[%s219 + $0xd8] sm:$0xff]
      %v370 = vld [vmem:[%s219 + $0xe0] sm:$0xff]
      %v371 = vld [vmem:[%s219 + $0xe8] sm:$0xff]
      %v372 = vld [vmem:[%s219 + $0xf0] sm:$0xff]
      %v373 = vld [vmem:[%s219 + $0xf8] sm:$0xff]
      %v375 = vlaneseq
      %v376 = vshrl.u32 %v375, 7
      %v377 = vsub.s32 0, %v376
      %v378 = vrot.slane %v226, %v377
      %v380 = vmul.f32 %v342, %v378
      %v381 = vmul.f32 %v343, %v378
      %v382 = vmul.f32 %v344, %v378
      %v383 = vmul.f32 %v345, %v378
      %v384 = vmul.f32 %v346, %v378
      %v385 = vmul.f32 %v347, %v378
      %v386 = vmul.f32 %v348, %v378
      %v387 = vmul.f32 %v349, %v378
      %v388 = vmul.f32 %v350, %v378
      %v389 = vmul.f32 %v351, %v378
      %v390 = vmul.f32 %v352, %v378
      %v391 = vmul.f32 %v353, %v378
      %v392 = vmul.f32 %v354, %v378
      %v393 = vmul.f32 %v355, %v378
      %v394 = vmul.f32 %v356, %v378
      %v395 = vmul.f32 %v357, %v378
      %v396 = vmul.f32 %v358, %v378
      %v397 = vmul.f32 %v359, %v378
      %v398 = vmul.f32 %v360, %v378
      %v399 = vmul.f32 %v361, %v378
      %v400 = vmul.f32 %v362, %v378
      %v401 = vmul.f32 %v363, %v378
      %v402 = vmul.f32 %v364, %v378
      %v403 = vmul.f32 %v365, %v378
      %v404 = vmul.f32 %v366, %v378
      %v405 = vmul.f32 %v367, %v378
      %v406 = vmul.f32 %v368, %v378
      %v407 = vmul.f32 %v369, %v378
      %v408 = vmul.f32 %v370, %v378
      %v409 = vmul.f32 %v371, %v378
      %v410 = vmul.f32 %v372, %v378
      %v411 = vmul.f32 %v373, %v378
      %v413 = vlaneseq
      %v414 = vshrl.u32 %v413, 7
      %v415 = vsub.s32 0, %v414
      %v416 = vrot.slane %v227, %v415
      %v418 = vadd.f32 %v380, %v416
      %v419 = vadd.f32 %v381, %v416
      %v420 = vadd.f32 %v382, %v416
      %v421 = vadd.f32 %v383, %v416
      %v422 = vadd.f32 %v384, %v416
      %v423 = vadd.f32 %v385, %v416
      %v424 = vadd.f32 %v386, %v416
      %v425 = vadd.f32 %v387, %v416
      %v426 = vadd.f32 %v388, %v416
      %v427 = vadd.f32 %v389, %v416
      %v428 = vadd.f32 %v390, %v416
      %v429 = vadd.f32 %v391, %v416
      %v430 = vadd.f32 %v392, %v416
      %v431 = vadd.f32 %v393, %v416
      %v432 = vadd.f32 %v394, %v416
      %v433 = vadd.f32 %v395, %v416
      %v434 = vadd.f32 %v396, %v416
      %v435 = vadd.f32 %v397, %v416
      %v436 = vadd.f32 %v398, %v416
      %v437 = vadd.f32 %v399, %v416
      %v438 = vadd.f32 %v400, %v416
      %v439 = vadd.f32 %v401, %v416
      %v440 = vadd.f32 %v402, %v416
      %v441 = vadd.f32 %v403, %v416
      %v442 = vadd.f32 %v404, %v416
      %v443 = vadd.f32 %v405, %v416
      %v444 = vadd.f32 %v406, %v416
      %v445 = vadd.f32 %v407, %v416
      %v446 = vadd.f32 %v408, %v416
      %v447 = vadd.f32 %v409, %v416
      %v448 = vadd.f32 %v410, %v416
      %v449 = vadd.f32 %v411, %v416
      %v450 = vmax.f32 %v418, 0.0
      %v451 = vmax.f32 %v419, 0.0
      %v452 = vmax.f32 %v420, 0.0
      %v453 = vmax.f32 %v421, 0.0
      %v454 = vmax.f32 %v422, 0.0
      %v455 = vmax.f32 %v423, 0.0
      %v456 = vmax.f32 %v424, 0.0
      %v457 = vmax.f32 %v425, 0.0
      %v458 = vmax.f32 %v426, 0.0
      %v459 = vmax.f32 %v427, 0.0
      %v460 = vmax.f32 %v428, 0.0
      %v461 = vmax.f32 %v429, 0.0
      %v462 = vmax.f32 %v430, 0.0
      %v463 = vmax.f32 %v431, 0.0
      %v464 = vmax.f32 %v432, 0.0
      %v465 = vmax.f32 %v433, 0.0
      %v466 = vmax.f32 %v434, 0.0
      %v467 = vmax.f32 %v435, 0.0
      %v468 = vmax.f32 %v436, 0.0
      %v469 = vmax.f32 %v437, 0.0
      %v470 = vmax.f32 %v438, 0.0
      %v471 = vmax.f32 %v439, 0.0
      %v472 = vmax.f32 %v440, 0.0
      %v473 = vmax.f32 %v441, 0.0
      %v474 = vmax.f32 %v442, 0.0
      %v475 = vmax.f32 %v443, 0.0
      %v476 = vmax.f32 %v444, 0.0
      %v477 = vmax.f32 %v445, 0.0
      %v478 = vmax.f32 %v446, 0.0
      %v479 = vmax.f32 %v447, 0.0
      %v480 = vmax.f32 %v448, 0.0
      %v481 = vmax.f32 %v449, 0.0
      %v482 = vpack.c.bf16 %v451, %v450
      %v483 = vpack.c.bf16 %v453, %v452
      %v484 = vpack.c.bf16 %v455, %v454
      %v485 = vpack.c.bf16 %v457, %v456
      %v486 = vpack.c.bf16 %v459, %v458
      %v487 = vpack.c.bf16 %v461, %v460
      %v488 = vpack.c.bf16 %v463, %v462
      %v489 = vpack.c.bf16 %v465, %v464
      %v490 = vpack.c.bf16 %v467, %v466
      %v491 = vpack.c.bf16 %v469, %v468
      %v492 = vpack.c.bf16 %v471, %v470
      %v493 = vpack.c.bf16 %v473, %v472
      %v494 = vpack.c.bf16 %v475, %v474
      %v495 = vpack.c.bf16 %v477, %v476
      %v496 = vpack.c.bf16 %v479, %v478
      %v497 = vpack.c.bf16 %v481, %v480
      %514 = vrot.lane.b32.xlu0 %v482, 4
      %v515 = vpop.permute.xlu0 %514
      %516 = vrot.lane.b32.xlu0 %v483, 4
      %v517 = vpop.permute.xlu0 %516
      %518 = vrot.lane.b32.xlu0 %v484, 4
      %v519 = vpop.permute.xlu0 %518
      %520 = vrot.lane.b32.xlu0 %v485, 4
      %v521 = vpop.permute.xlu0 %520
      %522 = vrot.lane.b32.xlu0 %v486, 4
      %v523 = vpop.permute.xlu0 %522
      %524 = vrot.lane.b32.xlu0 %v487, 4
      %v525 = vpop.permute.xlu0 %524
      %526 = vrot.lane.b32.xlu0 %v488, 4
      %v527 = vpop.permute.xlu0 %526
      %528 = vrot.lane.b32.xlu0 %v489, 4
      %v529 = vpop.permute.xlu0 %528
      %530 = vrot.lane.b32.xlu0 %v490, 4
      %v531 = vpop.permute.xlu0 %530
      %532 = vrot.lane.b32.xlu0 %v491, 4
      %v533 = vpop.permute.xlu0 %532
      %534 = vrot.lane.b32.xlu0 %v492, 4
      %v535 = vpop.permute.xlu0 %534
      %536 = vrot.lane.b32.xlu0 %v493, 4
      %v537 = vpop.permute.xlu0 %536
      %538 = vrot.lane.b32.xlu0 %v494, 4
      %v539 = vpop.permute.xlu0 %538
      %540 = vrot.lane.b32.xlu0 %v495, 4
      %v541 = vpop.permute.xlu0 %540
      %542 = vrot.lane.b32.xlu0 %v496, 4
      %v543 = vpop.permute.xlu0 %542
      %544 = vrot.lane.b32.xlu0 %v497, 4
      %v545 = vpop.permute.xlu0 %544
      %vm562 = vcmask 64544
      %563 = vst.msk [vmem:[%s239] sm:$0xff] %vm562, %v515
      %564 = vst.msk [vmem:[%s239 + $0x8] sm:$0xff] %vm562, %v517
      %565 = vst.msk [vmem:[%s239 + $0x10] sm:$0xff] %vm562, %v519
      %566 = vst.msk [vmem:[%s239 + $0x18] sm:$0xff] %vm562, %v521
      %567 = vst.msk [vmem:[%s239 + $0x20] sm:$0xff] %vm562, %v523
      %568 = vst.msk [vmem:[%s239 + $0x28] sm:$0xff] %vm562, %v525
      %569 = vst.msk [vmem:[%s239 + $0x30] sm:$0xff] %vm562, %v527
      %570 = vst.msk [vmem:[%s239 + $0x38] sm:$0xff] %vm562, %v529
      %571 = vst.msk [vmem:[%s239 + $0x40] sm:$0xff] %vm562, %v531
      %572 = vst.msk [vmem:[%s239 + $0x48] sm:$0xff] %vm562, %v533
      %573 = vst.msk [vmem:[%s239 + $0x50] sm:$0xff] %vm562, %v535
      %574 = vst.msk [vmem:[%s239 + $0x58] sm:$0xff] %vm562, %v537
      %575 = vst.msk [vmem:[%s239 + $0x60] sm:$0xff] %vm562, %v539
      %576 = vst.msk [vmem:[%s239 + $0x68] sm:$0xff] %vm562, %v541
      %577 = vst.msk [vmem:[%s239 + $0x70] sm:$0xff] %vm562, %v543
      %578 = vst.msk [vmem:[%s239 + $0x78] sm:$0xff] %vm562, %v545
      %v580 = vshrl.u32 %v482, 16
      %v582 = vrot.slane %v580, 7
      %v583 = vshll.u32 %v482, 16
      %v585 = vor.u32 %v582, %v583
      %v587 = vshrl.u32 %v483, 16
      %v589 = vrot.slane %v587, 7
      %v590 = vshll.u32 %v483, 16
      %v592 = vor.u32 %v589, %v590
      %v594 = vshrl.u32 %v484, 16
      %v596 = vrot.slane %v594, 7
      %v597 = vshll.u32 %v484, 16
      %v599 = vor.u32 %v596, %v597
      %v601 = vshrl.u32 %v485, 16
      %v603 = vrot.slane %v601, 7
      %v604 = vshll.u32 %v485, 16
      %v606 = vor.u32 %v603, %v604
      %v608 = vshrl.u32 %v486, 16
      %v610 = vrot.slane %v608, 7
      %v611 = vshll.u32 %v486, 16
      %v613 = vor.u32 %v610, %v611
      %v615 = vshrl.u32 %v487, 16
      %v617 = vrot.slane %v615, 7
      %v618 = vshll.u32 %v487, 16
      %v620 = vor.u32 %v617, %v618
      %v622 = vshrl.u32 %v488, 16
      %v624 = vrot.slane %v622, 7
      %v625 = vshll.u32 %v488, 16
      %v627 = vor.u32 %v624, %v625
      %v629 = vshrl.u32 %v489, 16
      %v631 = vrot.slane %v629, 7
      %v632 = vshll.u32 %v489, 16
      %v634 = vor.u32 %v631, %v632
      %v636 = vshrl.u32 %v490, 16
      %v638 = vrot.slane %v636, 7
      %v639 = vshll.u32 %v490, 16
      %v641 = vor.u32 %v638, %v639
      %v643 = vshrl.u32 %v491, 16
      %v645 = vrot.slane %v643, 7
      %v646 = vshll.u32 %v491, 16
      %v648 = vor.u32 %v645, %v646
      %v650 = vshrl.u32 %v492, 16
      %v652 = vrot.slane %v650, 7
      %v653 = vshll.u32 %v492, 16
      %v655 = vor.u32 %v652, %v653
      %v657 = vshrl.u32 %v493, 16
      %v659 = vrot.slane %v657, 7
      %v660 = vshll.u32 %v493, 16
      %v662 = vor.u32 %v659, %v660
      %v664 = vshrl.u32 %v494, 16
      %v666 = vrot.slane %v664, 7
      %v667 = vshll.u32 %v494, 16
      %v669 = vor.u32 %v666, %v667
      %v671 = vshrl.u32 %v495, 16
      %v673 = vrot.slane %v671, 7
      %v674 = vshll.u32 %v495, 16
      %v676 = vor.u32 %v673, %v674
      %v678 = vshrl.u32 %v496, 16
      %v680 = vrot.slane %v678, 7
      %v681 = vshll.u32 %v496, 16
      %v683 = vor.u32 %v680, %v681
      %v685 = vshrl.u32 %v497, 16
      %v687 = vrot.slane %v685, 7
      %v688 = vshll.u32 %v497, 16
      %v690 = vor.u32 %v687, %v688
      %vm707 = vcmask 31744
      %vm708 = vsmask.f32 7938
      %vm709 = vmand %vm707, %vm708
      %v710 = vld [vmem:[%s239] sm:$0xff]
      %v711 = vsel %vm709, %v585, %v710
      %712 = vst [vmem:[%s239] sm:$0xff] %v711
      %v713 = vld [vmem:[%s239 + $0x8] sm:$0xff]
      %v714 = vsel %vm709, %v592, %v713
      %715 = vst [vmem:[%s239 + $0x8] sm:$0xff] %v714
      %v716 = vld [vmem:[%s239 + $0x10] sm:$0xff]
      %v717 = vsel %vm709, %v599, %v716
      %718 = vst [vmem:[%s239 + $0x10] sm:$0xff] %v717
      %v719 = vld [vmem:[%s239 + $0x18] sm:$0xff]
      %v720 = vsel %vm709, %v606, %v719
      %721 = vst [vmem:[%s239 + $0x18] sm:$0xff] %v720
      %v722 = vld [vmem:[%s239 + $0x20] sm:$0xff]
      %v723 = vsel %vm709, %v613, %v722
      %724 = vst [vmem:[%s239 + $0x20] sm:$0xff] %v723
      %v725 = vld [vmem:[%s239 + $0x28] sm:$0xff]
      %v726 = vsel %vm709, %v620, %v725
      %727 = vst [vmem:[%s239 + $0x28] sm:$0xff] %v726
      %v728 = vld [vmem:[%s239 + $0x30] sm:$0xff]
      %v729 = vsel %vm709, %v627, %v728
      %730 = vst [vmem:[%s239 + $0x30] sm:$0xff] %v729
      %v731 = vld [vmem:[%s239 + $0x38] sm:$0xff]
      %v732 = vsel %vm709, %v634, %v731
      %733 = vst [vmem:[%s239 + $0x38] sm:$0xff] %v732
      %v734 = vld [vmem:[%s239 + $0x40] sm:$0xff]
      %v735 = vsel %vm709, %v641, %v734
      %736 = vst [vmem:[%s239 + $0x40] sm:$0xff] %v735
      %v737 = vld [vmem:[%s239 + $0x48] sm:$0xff]
      %v738 = vsel %vm709, %v648, %v737
      %739 = vst [vmem:[%s239 + $0x48] sm:$0xff] %v738
      %v740 = vld [vmem:[%s239 + $0x50] sm:$0xff]
      %v741 = vsel %vm709, %v655, %v740
      %742 = vst [vmem:[%s239 + $0x50] sm:$0xff] %v741
      %v743 = vld [vmem:[%s239 + $0x58] sm:$0xff]
      %v744 = vsel %vm709, %v662, %v743
      %745 = vst [vmem:[%s239 + $0x58] sm:$0xff] %v744
      %v746 = vld [vmem:[%s239 + $0x60] sm:$0xff]
      %v747 = vsel %vm709, %v669, %v746
      %748 = vst [vmem:[%s239 + $0x60] sm:$0xff] %v747
      %v749 = vld [vmem:[%s239 + $0x68] sm:$0xff]
      %v750 = vsel %vm709, %v676, %v749
      %751 = vst [vmem:[%s239 + $0x68] sm:$0xff] %v750
      %v752 = vld [vmem:[%s239 + $0x70] sm:$0xff]
      %v753 = vsel %vm709, %v683, %v752
      %754 = vst [vmem:[%s239 + $0x70] sm:$0xff] %v753
      %v755 = vld [vmem:[%s239 + $0x78] sm:$0xff]
      %v756 = vsel %vm709, %v690, %v755
      %757 = vst [vmem:[%s239 + $0x78] sm:$0xff] %v756
      %v758 = vrot.slane %v583, 1
      %v759 = vor.u32 %v580, %v758
      %v760 = vrot.slane %v590, 1
      %v761 = vor.u32 %v587, %v760
      %v762 = vrot.slane %v597, 1
      %v763 = vor.u32 %v594, %v762
      %v764 = vrot.slane %v604, 1
      %v765 = vor.u32 %v601, %v764
      %v766 = vrot.slane %v611, 1
      %v767 = vor.u32 %v608, %v766
      %v768 = vrot.slane %v618, 1
      %v769 = vor.u32 %v615, %v768
      %v770 = vrot.slane %v625, 1
      %v771 = vor.u32 %v622, %v770
      %v772 = vrot.slane %v632, 1
      %v773 = vor.u32 %v629, %v772
      %v774 = vrot.slane %v639, 1
      %v775 = vor.u32 %v636, %v774
      %v776 = vrot.slane %v646, 1
      %v777 = vor.u32 %v643, %v776
      %v778 = vrot.slane %v653, 1
      %v779 = vor.u32 %v650, %v778
      %v780 = vrot.slane %v660, 1
      %v781 = vor.u32 %v657, %v780
      %v782 = vrot.slane %v667, 1
      %v783 = vor.u32 %v664, %v782
      %v784 = vrot.slane %v674, 1
      %v785 = vor.u32 %v671, %v784
      %v786 = vrot.slane %v681, 1
      %v787 = vor.u32 %v678, %v786
      %v788 = vrot.slane %v688, 1
      %v789 = vor.u32 %v685, %v788
      %790 = vrot.lane.b32.xlu0 %v759, 8
      %v791 = vpop.permute.xlu0 %790
      %792 = vrot.lane.b32.xlu0 %v761, 8
      %v793 = vpop.permute.xlu0 %792
      %794 = vrot.lane.b32.xlu0 %v763, 8
      %v795 = vpop.permute.xlu0 %794
      %796 = vrot.lane.b32.xlu0 %v765, 8
      %v797 = vpop.permute.xlu0 %796
      %798 = vrot.lane.b32.xlu0 %v767, 8
      %v799 = vpop.permute.xlu0 %798
      %800 = vrot.lane.b32.xlu0 %v769, 8
      %v801 = vpop.permute.xlu0 %800
      %802 = vrot.lane.b32.xlu0 %v771, 8
      %v803 = vpop.permute.xlu0 %802
      %804 = vrot.lane.b32.xlu0 %v773, 8
      %v805 = vpop.permute.xlu0 %804
      %806 = vrot.lane.b32.xlu0 %v775, 8
      %v807 = vpop.permute.xlu0 %806
      %808 = vrot.lane.b32.xlu0 %v777, 8
      %v809 = vpop.permute.xlu0 %808
      %810 = vrot.lane.b32.xlu0 %v779, 8
      %v811 = vpop.permute.xlu0 %810
      %812 = vrot.lane.b32.xlu0 %v781, 8
      %v813 = vpop.permute.xlu0 %812
      %814 = vrot.lane.b32.xlu0 %v783, 8
      %v815 = vpop.permute.xlu0 %814
      %816 = vrot.lane.b32.xlu0 %v785, 8
      %v817 = vpop.permute.xlu0 %816
      %818 = vrot.lane.b32.xlu0 %v787, 8
      %v819 = vpop.permute.xlu0 %818
      %820 = vrot.lane.b32.xlu0 %v789, 8
      %v821 = vpop.permute.xlu0 %820
      %vm838 = vcmask 97344
      %vm839 = vsmask.f32 7424
      %vm840 = vmand %vm838, %vm839
      %v841 = vld [vmem:[%s239] sm:$0xff]
      %v842 = vsel %vm840, %v791, %v841
      %843 = vst [vmem:[%s239] sm:$0xff] %v842
      %v844 = vld [vmem:[%s239 + $0x8] sm:$0xff]
      %v845 = vsel %vm840, %v793, %v844
      %846 = vst [vmem:[%s239 + $0x8] sm:$0xff] %v845
      %v847 = vld [vmem:[%s239 + $0x10] sm:$0xff]
      %v848 = vsel %vm840, %v795, %v847
      %849 = vst [vmem:[%s239 + $0x10] sm:$0xff] %v848
      %v850 = vld [vmem:[%s239 + $0x18] sm:$0xff]
      %v851 = vsel %vm840, %v797, %v850
      %852 = vst [vmem:[%s239 + $0x18] sm:$0xff] %v851
      %v853 = vld [vmem:[%s239 + $0x20] sm:$0xff]
      %v854 = vsel %vm840, %v799, %v853
      %855 = vst [vmem:[%s239 + $0x20] sm:$0xff] %v854
      %v856 = vld [vmem:[%s239 + $0x28] sm:$0xff]
      %v857 = vsel %vm840, %v801, %v856
      %858 = vst [vmem:[%s239 + $0x28] sm:$0xff] %v857
      %v859 = vld [vmem:[%s239 + $0x30] sm:$0xff]
      %v860 = vsel %vm840, %v803, %v859
      %861 = vst [vmem:[%s239 + $0x30] sm:$0xff] %v860
      %v862 = vld [vmem:[%s239 + $0x38] sm:$0xff]
      %v863 = vsel %vm840, %v805, %v862
      %864 = vst [vmem:[%s239 + $0x38] sm:$0xff] %v863
      %v865 = vld [vmem:[%s239 + $0x40] sm:$0xff]
      %v866 = vsel %vm840, %v807, %v865
      %867 = vst [vmem:[%s239 + $0x40] sm:$0xff] %v866
      %v868 = vld [vmem:[%s239 + $0x48] sm:$0xff]
      %v869 = vsel %vm840, %v809, %v868
      %870 = vst [vmem:[%s239 + $0x48] sm:$0xff] %v869
      %v871 = vld [vmem:[%s239 + $0x50] sm:$0xff]
      %v872 = vsel %vm840, %v811, %v871
      %873 = vst [vmem:[%s239 + $0x50] sm:$0xff] %v872
      %v874 = vld [vmem:[%s239 + $0x58] sm:$0xff]
      %v875 = vsel %vm840, %v813, %v874
      %876 = vst [vmem:[%s239 + $0x58] sm:$0xff] %v875
      %v877 = vld [vmem:[%s239 + $0x60] sm:$0xff]
      %v878 = vsel %vm840, %v815, %v877
      %879 = vst [vmem:[%s239 + $0x60] sm:$0xff] %v878
      %v880 = vld [vmem:[%s239 + $0x68] sm:$0xff]
      %v881 = vsel %vm840, %v817, %v880
      %882 = vst [vmem:[%s239 + $0x68] sm:$0xff] %v881
      %v883 = vld [vmem:[%s239 + $0x70] sm:$0xff]
      %v884 = vsel %vm840, %v819, %v883
      %885 = vst [vmem:[%s239 + $0x70] sm:$0xff] %v884
      %v886 = vld [vmem:[%s239 + $0x78] sm:$0xff]
      %v887 = vsel %vm840, %v821, %v886
      %888 = vst [vmem:[%s239 + $0x78] sm:$0xff] %v887
      %v889 = vld [vmem:[#allocation2] sm:$0xff]
      %v890 = vld [vmem:[#allocation2 + $0x8] sm:$0xff]
      %v891 = vld [vmem:[#allocation2 + $0x10] sm:$0xff]
      %v892 = vld [vmem:[#allocation2 + $0x18] sm:$0xff]
      %v893 = vld [vmem:[#allocation2 + $0x20] sm:$0xff]
      %v894 = vld [vmem:[#allocation2 + $0x28] sm:$0xff]
      %v895 = vld [vmem:[#allocation2 + $0x30] sm:$0xff]
      %v896 = vld [vmem:[#allocation2 + $0x38] sm:$0xff]
      %v897 = vld [vmem:[#allocation2 + $0x40] sm:$0xff]
      %v898 = vld [vmem:[#allocation2 + $0x48] sm:$0xff]
      %v899 = vld [vmem:[#allocation2 + $0x50] sm:$0xff]
      %v900 = vld [vmem:[#allocation2 + $0x58] sm:$0xff]
      %v901 = vld [vmem:[#allocation2 + $0x60] sm:$0xff]
      %v902 = vld [vmem:[#allocation2 + $0x68] sm:$0xff]
      %v903 = vld [vmem:[#allocation2 + $0x70] sm:$0xff]
      %v904 = vld [vmem:[#allocation2 + $0x78] sm:$0xff]
      %v905 = vld [vmem:[%s3] sm:$0xf]
      %v906 = vld [vmem:[%s3 + $0x4] sm:$0x3]
      %v909 = vunpack.c.l.b16 %v905
      %v910 = vunpack.c.l.b16 %v906
      %v911 = vpack.c.b16 %v910, %v909
      %v913 = vsel %vm235, %v889, 0
      %v916 = vsel %vm235, %v890, 0
      %v919 = vsel %vm235, %v891, 0
      %v922 = vsel %vm235, %v892, 0
      %v925 = vsel %vm235, %v893, 0
      %v928 = vsel %vm235, %v894, 0
      %v931 = vsel %vm235, %v895, 0
      %v934 = vsel %vm235, %v896, 0
      %v937 = vsel %vm235, %v897, 0
      %v940 = vsel %vm235, %v898, 0
      %v943 = vsel %vm235, %v899, 0
      %v946 = vsel %vm235, %v900, 0
      %v949 = vsel %vm235, %v901, 0
      %v952 = vsel %vm235, %v902, 0
      %v955 = vsel %vm235, %v903, 0
      %v958 = vsel %vm235, %v904, 0
      %vm960 = vcmask 1045504
      %v962 = vsel %vm960, %v911, 0
      %964 = vmatprep.subr.bf16.mxu0 0
      %965 = vmatpush1.bf16.msra.mxu0 %v962
      %966 = vmatprep.subr.bf16.mxu0 0
      %967 = vmatpush1.bf16.msra.mxu0 0
      %968 = vmatprep.subr.bf16.mxu0 0
      %969 = vmatpush1.bf16.msra.mxu0 0
      %970 = vmatprep.subr.bf16.mxu0 0
      %971 = vmatpush1.bf16.msra.mxu0 0
      %972 = vmatprep.subr.bf16.mxu0 0
      %973 = vmatpush1.bf16.msra.mxu0 0
      %974 = vmatprep.subr.bf16.mxu0 0
      %975 = vmatpush1.bf16.msra.mxu0 0
      %976 = vmatprep.subr.bf16.mxu0 0
      %977 = vmatpush1.bf16.msra.mxu0 0
      %978 = vmatprep.subr.bf16.mxu0 0
      %979 = vmatpush1.bf16.msra.mxu0 0
      %980 = vmatprep.subr.bf16.mxu0 0
      %981 = vmatpush1.bf16.msra.mxu0 0
      %982 = vmatprep.subr.bf16.mxu0 0
      %983 = vmatpush1.bf16.msra.mxu0 0
      %984 = vmatprep.subr.bf16.mxu0 0
      %985 = vmatpush1.bf16.msra.mxu0 0
      %986 = vmatprep.subr.bf16.mxu0 0
      %987 = vmatpush1.bf16.msra.mxu0 0
      %988 = vmatprep.subr.bf16.mxu0 0
      %989 = vmatpush1.bf16.msra.mxu0 0
      %990 = vmatprep.subr.bf16.mxu0 0
      %991 = vmatpush1.bf16.msra.mxu0 0
      %992 = vmatprep.subr.bf16.mxu0 0
      %993 = vmatpush1.bf16.msra.mxu0 0
      %994 = vmatprep.subr.bf16.mxu0 0
      %995 = vmatpush1.bf16.msra.mxu0 0
      %996 = vmatprep.mubr.bf16.mxu0 0
      %997 = vmatmul.mubr.bf16.gmra.mrb[0].mxu0 %v913
      %v998 = vpop.f32.mrb[0].mxu0
      %v999 = vadd.f32 0.0, %v998
      %v1000 = vpop.f32.mrb[0].mxu0
      %v1001 = vpop.f32.mrb[0].mxu0
      %v1002 = vadd.f32 0.0, %v1001
      %v1003 = vpop.f32.mrb[0].mxu0
      %1004 = vmatprep.mubr.bf16.mxu0 0
      %1005 = vmatmul.mubr.bf16.gmra.mrb[0].mxu0 %v916
      %v1006 = vpop.f32.mrb[0].mxu0
      %v1007 = vadd.f32 0.0, %v1006
      %v1008 = vpop.f32.mrb[0].mxu0
      %v1009 = vpop.f32.mrb[0].mxu0
      %v1010 = vadd.f32 0.0, %v1009
      %v1011 = vpop.f32.mrb[0].mxu0
      %1012 = vmatprep.mubr.bf16.mxu0 0
      %1013 = vmatmul.mubr.bf16.gmra.mrb[0].mxu0 %v919
      %v1014 = vpop.f32.mrb[0].mxu0
      %v1015 = vadd.f32 0.0, %v1014
      %v1016 = vpop.f32.mrb[0].mxu0
      %v1017 = vpop.f32.mrb[0].mxu0
      %v1018 = vadd.f32 0.0, %v1017
      %v1019 = vpop.f32.mrb[0].mxu0
      %1020 = vmatprep.mubr.bf16.mxu0 0
      %1021 = vmatmul.mubr.bf16.gmra.mrb[0].mxu0 %v922
      %v1022 = vpop.f32.mrb[0].mxu0
      %v1023 = vadd.f32 0.0, %v1022
      %v1024 = vpop.f32.mrb[0].mxu0
      %v1025 = vpop.f32.mrb[0].mxu0
      %v1026 = vadd.f32 0.0, %v1025
      %v1027 = vpop.f32.mrb[0].mxu0
      %1028 = vmatprep.mubr.bf16.mxu0 0
      %1029 = vmatmul.mubr.bf16.gmra.mrb[0].mxu0 %v925
      %v1030 = vpop.f32.mrb[0].mxu0
      %v1031 = vadd.f32 0.0, %v1030
      %v1032 = vpop.f32.mrb[0].mxu0
      %v1033 = vpop.f32.mrb[0].mxu0
      %v1034 = vadd.f32 0.0, %v1033
      %v1035 = vpop.f32.mrb[0].mxu0
      %1036 = vmatprep.mubr.bf16.mxu0 0
      %1037 = vmatmul.mubr.bf16.gmra.mrb[0].mxu0 %v928
      %v1038 = vpop.f32.mrb[0].mxu0
      %v1039 = vadd.f32 0.0, %v1038
      %v1040 = vpop.f32.mrb[0].mxu0
      %v1041 = vpop.f32.mrb[0].mxu0
      %v1042 = vadd.f32 0.0, %v1041
      %v1043 = vpop.f32.mrb[0].mxu0
      %1044 = vmatprep.mubr.bf16.mxu0 0
      %1045 = vmatmul.mubr.bf16.gmra.mrb[0].mxu0 %v931
      %v1046 = vpop.f32.mrb[0].mxu0
      %v1047 = vadd.f32 0.0, %v1046
      %v1048 = vpop.f32.mrb[0].mxu0
      %v1049 = vpop.f32.mrb[0].mxu0
      %v1050 = vadd.f32 0.0, %v1049
      %v1051 = vpop.f32.mrb[0].mxu0
      %1052 = vmatprep.mubr.bf16.mxu0 0
      %1053 = vmatmul.mubr.bf16.gmra.mrb[0].mxu0 %v934
      %v1054 = vpop.f32.mrb[0].mxu0
      %v1055 = vadd.f32 0.0, %v1054
      %v1056 = vpop.f32.mrb[0].mxu0
      %v1057 = vpop.f32.mrb[0].mxu0
      %v1058 = vadd.f32 0.0, %v1057
      %v1059 = vpop.f32.mrb[0].mxu0
      %1060 = vmatprep.mubr.bf16.mxu0 0
      %1061 = vmatmul.mubr.bf16.gmra.mrb[0].mxu0 %v937
      %v1062 = vpop.f32.mrb[0].mxu0
      %v1063 = vadd.f32 0.0, %v1062
      %v1064 = vpop.f32.mrb[0].mxu0
      %v1065 = vpop.f32.mrb[0].mxu0
      %v1066 = vadd.f32 0.0, %v1065
      %v1067 = vpop.f32.mrb[0].mxu0
      %1068 = vmatprep.mubr.bf16.mxu0 0
      %1069 = vmatmul.mubr.bf16.gmra.mrb[0].mxu0 %v940
      %v1070 = vpop.f32.mrb[0].mxu0
      %v1071 = vadd.f32 0.0, %v1070
      %v1072 = vpop.f32.mrb[0].mxu0
      %v1073 = vpop.f32.mrb[0].mxu0
      %v1074 = vadd.f32 0.0, %v1073
      %v1075 = vpop.f32.mrb[0].mxu0
      %1076 = vmatprep.mubr.bf16.mxu0 0
      %1077 = vmatmul.mubr.bf16.gmra.mrb[0].mxu0 %v943
      %v1078 = vpop.f32.mrb[0].mxu0
      %v1079 = vadd.f32 0.0, %v1078
      %v1080 = vpop.f32.mrb[0].mxu0
      %v1081 = vpop.f32.mrb[0].mxu0
      %v1082 = vadd.f32 0.0, %v1081
      %v1083 = vpop.f32.mrb[0].mxu0
      %1084 = vmatprep.mubr.bf16.mxu0 0
      %1085 = vmatmul.mubr.bf16.gmra.mrb[0].mxu0 %v946
      %v1086 = vpop.f32.mrb[0].mxu0
      %v1087 = vadd.f32 0.0, %v1086
      %v1088 = vpop.f32.mrb[0].mxu0
      %v1089 = vpop.f32.mrb[0].mxu0
      %v1090 = vadd.f32 0.0, %v1089
      %v1091 = vpop.f32.mrb[0].mxu0
      %1092 = vmatprep.mubr.bf16.mxu0 0
      %1093 = vmatmul.mubr.bf16.gmra.mrb[0].mxu0 %v949
      %v1094 = vpop.f32.mrb[0].mxu0
      %v1095 = vadd.f32 0.0, %v1094
      %v1096 = vpop.f32.mrb[0].mxu0
      %v1097 = vpop.f32.mrb[0].mxu0
      %v1098 = vadd.f32 0.0, %v1097
      %v1099 = vpop.f32.mrb[0].mxu0
      %1100 = vmatprep.mubr.bf16.mxu0 0
      %1101 = vmatmul.mubr.bf16.gmra.mrb[0].mxu0 %v952
      %v1102 = vpop.f32.mrb[0].mxu0
      %v1103 = vadd.f32 0.0, %v1102
      %v1104 = vpop.f32.mrb[0].mxu0
      %v1105 = vpop.f32.mrb[0].mxu0
      %v1106 = vadd.f32 0.0, %v1105
      %v1107 = vpop.f32.mrb[0].mxu0
      %1108 = vmatprep.mubr.bf16.mxu0 0
      %1109 = vmatmul.mubr.bf16.gmra.mrb[0].mxu0 %v955
      %v1110 = vpop.f32.mrb[0].mxu0
      %v1111 = vadd.f32 0.0, %v1110
      %v1112 = vpop.f32.mrb[0].mxu0
      %v1113 = vpop.f32.mrb[0].mxu0
      %v1114 = vadd.f32 0.0, %v1113
      %v1115 = vpop.f32.mrb[0].mxu0
      %1116 = vmatprep.mubr.bf16.mxu0 0
      %1117 = vmatmul.mubr.bf16.gmra.mrb[0].mxu0 %v958
      %v1118 = vpop.f32.mrb[0].mxu0
      %v1119 = vadd.f32 0.0, %v1118
      %v1120 = vpop.f32.mrb[0].mxu0
      %v1121 = vpop.f32.mrb[0].mxu0
      %v1122 = vadd.f32 0.0, %v1121
      %v1123 = vpop.f32.mrb[0].mxu0
      %1124 = vdwg.mxu0
      %v1125 = vadd.f32 %v233, %v999
      %v1126 = vadd.f32 %v233, %v1002
      %v1127 = vadd.f32 %v233, %v1007
      %v1128 = vadd.f32 %v233, %v1010
      %v1129 = vadd.f32 %v233, %v1015
      %v1130 = vadd.f32 %v233, %v1018
      %v1131 = vadd.f32 %v233, %v1023
      %v1132 = vadd.f32 %v233, %v1026
      %v1133 = vadd.f32 %v233, %v1031
      %v1134 = vadd.f32 %v233, %v1034
      %v1135 = vadd.f32 %v233, %v1039
      %v1136 = vadd.f32 %v233, %v1042
      %v1137 = vadd.f32 %v233, %v1047
      %v1138 = vadd.f32 %v233, %v1050
      %v1139 = vadd.f32 %v233, %v1055
      %v1140 = vadd.f32 %v233, %v1058
      %v1141 = vadd.f32 %v233, %v1063
      %v1142 = vadd.f32 %v233, %v1066
      %v1143 = vadd.f32 %v233, %v1071
      %v1144 = vadd.f32 %v233, %v1074
      %v1145 = vadd.f32 %v233, %v1079
      %v1146 = vadd.f32 %v233, %v1082
      %v1147 = vadd.f32 %v233, %v1087
      %v1148 = vadd.f32 %v233, %v1090
      %v1149 = vadd.f32 %v233, %v1095
      %v1150 = vadd.f32 %v233, %v1098
      %v1151 = vadd.f32 %v233, %v1103
      %v1152 = vadd.f32 %v233, %v1106
      %v1153 = vadd.f32 %v233, %v1111
      %v1154 = vadd.f32 %v233, %v1114
      %v1155 = vadd.f32 %v233, %v1119
      %v1156 = vadd.f32 %v233, %v1122
      %vm1157 = vcmask 64512
      %1158 = vst.msk [vmem:[#allocation3] sm:$0xff] %vm1157, %v1125
      %1159 = vst.msk [vmem:[#allocation3 + $0x8] sm:$0xff] %vm1157, %v1126
      %1160 = vst.msk [vmem:[#allocation3 + $0x10] sm:$0xff] %vm1157, %v1127
      %1161 = vst.msk [vmem:[#allocation3 + $0x18] sm:$0xff] %vm1157, %v1128
      %1162 = vst.msk [vmem:[#allocation3 + $0x20] sm:$0xff] %vm1157, %v1129
      %1163 = vst.msk [vmem:[#allocation3 + $0x28] sm:$0xff] %vm1157, %v1130
      %1164 = vst.msk [vmem:[#allocation3 + $0x30] sm:$0xff] %vm1157, %v1131
      %1165 = vst.msk [vmem:[#allocation3 + $0x38] sm:$0xff] %vm1157, %v1132
      %1166 = vst.msk [vmem:[#allocation3 + $0x40] sm:$0xff] %vm1157, %v1133
      %1167 = vst.msk [vmem:[#allocation3 + $0x48] sm:$0xff] %vm1157, %v1134
      %1168 = vst.msk [vmem:[#allocation3 + $0x50] sm:$0xff] %vm1157, %v1135
      %1169 = vst.msk [vmem:[#allocation3 + $0x58] sm:$0xff] %vm1157, %v1136
      %1170 = vst.msk [vmem:[#allocation3 + $0x60] sm:$0xff] %vm1157, %v1137
      %1171 = vst.msk [vmem:[#allocation3 + $0x68] sm:$0xff] %vm1157, %v1138
      %1172 = vst.msk [vmem:[#allocation3 + $0x70] sm:$0xff] %vm1157, %v1139
      %1173 = vst.msk [vmem:[#allocation3 + $0x78] sm:$0xff] %vm1157, %v1140
      %1174 = vst.msk [vmem:[#allocation3 + $0x80] sm:$0xff] %vm1157, %v1141
      %1175 = vst.msk [vmem:[#allocation3 + $0x88] sm:$0xff] %vm1157, %v1142
      %1176 = vst.msk [vmem:[#allocation3 + $0x90] sm:$0xff] %vm1157, %v1143
      %1177 = vst.msk [vmem:[#allocation3 + $0x98] sm:$0xff] %vm1157, %v1144
      %1178 = vst.msk [vmem:[#allocation3 + $0xa0] sm:$0xff] %vm1157, %v1145
      %1179 = vst.msk [vmem:[#allocation3 + $0xa8] sm:$0xff] %vm1157, %v1146
      %1180 = vst.msk [vmem:[#allocation3 + $0xb0] sm:$0xff] %vm1157, %v1147
      %1181 = vst.msk [vmem:[#allocation3 + $0xb8] sm:$0xff] %vm1157, %v1148
      %1182 = vst.msk [vmem:[#allocation3 + $0xc0] sm:$0xff] %vm1157, %v1149
      %1183 = vst.msk [vmem:[#allocation3 + $0xc8] sm:$0xff] %vm1157, %v1150
      %1184 = vst.msk [vmem:[#allocation3 + $0xd0] sm:$0xff] %vm1157, %v1151
      %1185 = vst.msk [vmem:[#allocation3 + $0xd8] sm:$0xff] %vm1157, %v1152
      %1186 = vst.msk [vmem:[#allocation3 + $0xe0] sm:$0xff] %vm1157, %v1153
      %1187 = vst.msk [vmem:[#allocation3 + $0xe8] sm:$0xff] %vm1157, %v1154
      %1188 = vst.msk [vmem:[#allocation3 + $0xf0] sm:$0xff] %vm1157, %v1155
      %1189 = vst.msk [vmem:[#allocation3 + $0xf8] sm:$0xff] %vm1157, %v1156
      %v1190 = vld [vmem:[%s239] sm:$0xff]
      %v1191 = vld [vmem:[%s239 + $0x8] sm:$0xff]
      %v1192 = vld [vmem:[%s239 + $0x10] sm:$0xff]
      %v1193 = vld [vmem:[%s239 + $0x18] sm:$0xff]
      %v1194 = vld [vmem:[%s239 + $0x20] sm:$0xff]
      %v1195 = vld [vmem:[%s239 + $0x28] sm:$0xff]
      %v1196 = vld [vmem:[%s239 + $0x30] sm:$0xff]
      %v1197 = vld [vmem:[%s239 + $0x38] sm:$0xff]
      %v1198 = vld [vmem:[%s239 + $0x40] sm:$0xff]
      %v1199 = vld [vmem:[%s239 + $0x48] sm:$0xff]
      %v1200 = vld [vmem:[%s239 + $0x50] sm:$0xff]
      %v1201 = vld [vmem:[%s239 + $0x58] sm:$0xff]
      %v1202 = vld [vmem:[%s239 + $0x60] sm:$0xff]
      %v1203 = vld [vmem:[%s239 + $0x68] sm:$0xff]
      %v1204 = vld [vmem:[%s239 + $0x70] sm:$0xff]
      %v1205 = vld [vmem:[%s239 + $0x78] sm:$0xff]
      %v1206 = vld [vmem:[#allocation3] sm:$0xff]
      %v1207 = vld [vmem:[#allocation3 + $0x8] sm:$0xff]
      %v1208 = vld [vmem:[#allocation3 + $0x10] sm:$0xff]
      %v1209 = vld [vmem:[#allocation3 + $0x18] sm:$0xff]
      %v1210 = vld [vmem:[#allocation3 + $0x20] sm:$0xff]
      %v1211 = vld [vmem:[#allocation3 + $0x28] sm:$0xff]
      %v1212 = vld [vmem:[#allocation3 + $0x30] sm:$0xff]
      %v1213 = vld [vmem:[#allocation3 + $0x38] sm:$0xff]
      %v1214 = vld [vmem:[#allocation3 + $0x40] sm:$0xff]
      %v1215 = vld [vmem:[#allocation3 + $0x48] sm:$0xff]
      %v1216 = vld [vmem:[#allocation3 + $0x50] sm:$0xff]
      %v1217 = vld [vmem:[#allocation3 + $0x58] sm:$0xff]
      %v1218 = vld [vmem:[#allocation3 + $0x60] sm:$0xff]
      %v1219 = vld [vmem:[#allocation3 + $0x68] sm:$0xff]
      %v1220 = vld [vmem:[#allocation3 + $0x70] sm:$0xff]
      %v1221 = vld [vmem:[#allocation3 + $0x78] sm:$0xff]
      %v1222 = vld [vmem:[#allocation3 + $0x80] sm:$0xff]
      %v1223 = vld [vmem:[#allocation3 + $0x88] sm:$0xff]
      %v1224 = vld [vmem:[#allocation3 + $0x90] sm:$0xff]
      %v1225 = vld [vmem:[#allocation3 + $0x98] sm:$0xff]
      %v1226 = vld [vmem:[#allocation3 + $0xa0] sm:$0xff]
      %v1227 = vld [vmem:[#allocation3 + $0xa8] sm:$0xff]
      %v1228 = vld [vmem:[#allocation3 + $0xb0] sm:$0xff]
      %v1229 = vld [vmem:[#allocation3 + $0xb8] sm:$0xff]
      %v1230 = vld [vmem:[#allocation3 + $0xc0] sm:$0xff]
      %v1231 = vld [vmem:[#allocation3 + $0xc8] sm:$0xff]
      %v1232 = vld [vmem:[#allocation3 + $0xd0] sm:$0xff]
      %v1233 = vld [vmem:[#allocation3 + $0xd8] sm:$0xff]
      %v1234 = vld [vmem:[#allocation3 + $0xe0] sm:$0xff]
      %v1235 = vld [vmem:[#allocation3 + $0xe8] sm:$0xff]
      %v1236 = vld [vmem:[#allocation3 + $0xf0] sm:$0xff]
      %v1237 = vld [vmem:[#allocation3 + $0xf8] sm:$0xff]
      %s1238 = scalar_lea.vmem %s3, 8
      %v1239 = vld [vmem:[%s1238] sm:$0xf]
      %v1240 = vld [vmem:[%s1238 + $0x4] sm:$0x3]
      %v1243 = vunpack.c.l.b16 %v1239
      %v1244 = vunpack.c.l.b16 %v1240
      %v1245 = vpack.c.b16 %v1244, %v1243
      %v1247 = vsel %vm235, %v1190, 0
      %v1250 = vsel %vm235, %v1191, 0
      %v1253 = vsel %vm235, %v1192, 0
      %v1256 = vsel %vm235, %v1193, 0
      %v1259 = vsel %vm235, %v1194, 0
      %v1262 = vsel %vm235, %v1195, 0
      %v1265 = vsel %vm235, %v1196, 0
      %v1268 = vsel %vm235, %v1197, 0
      %v1271 = vsel %vm235, %v1198, 0
      %v1274 = vsel %vm235, %v1199, 0
      %v1277 = vsel %vm235, %v1200, 0
      %v1280 = vsel %vm235, %v1201, 0
      %v1283 = vsel %vm235, %v1202, 0
      %v1286 = vsel %vm235, %v1203, 0
      %v1289 = vsel %vm235, %v1204, 0
      %v1292 = vsel %vm235, %v1205, 0
      %v1295 = vsel %vm960, %v1245, 0
      %1297 = vmatprep.subr.bf16.mxu0 0
      %1298 = vmatpush1.bf16.msra.mxu0 %v1295
      %1299 = vmatprep.subr.bf16.mxu0 0
      %1300 = vmatpush1.bf16.msra.mxu0 0
      %1301 = vmatprep.subr.bf16.mxu0 0
      %1302 = vmatpush1.bf16.msra.mxu0 0
      %1303 = vmatprep.subr.bf16.mxu0 0
      %1304 = vmatpush1.bf16.msra.mxu0 0
      %1305 = vmatprep.subr.bf16.mxu0 0
      %1306 = vmatpush1.bf16.msra.mxu0 0
      %1307 = vmatprep.subr.bf16.mxu0 0
      %1308 = vmatpush1.bf16.msra.mxu0 0
      %1309 = vmatprep.subr.bf16.mxu0 0
      %1310 = vmatpush1.bf16.msra.mxu0 0
      %1311 = vmatprep.subr.bf16.mxu0 0
      %1312 = vmatpush1.bf16.msra.mxu0 0
      %1313 = vmatprep.subr.bf16.mxu0 0
      %1314 = vmatpush1.bf16.msra.mxu0 0
      %1315 = vmatprep.subr.bf16.mxu0 0
      %1316 = vmatpush1.bf16.msra.mxu0 0
      %1317 = vmatprep.subr.bf16.mxu0 0
      %1318 = vmatpush1.bf16.msra.mxu0 0
      %1319 = vmatprep.subr.bf16.mxu0 0
      %1320 = vmatpush1.bf16.msra.mxu0 0
      %1321 = vmatprep.subr.bf16.mxu0 0
      %1322 = vmatpush1.bf16.msra.mxu0 0
      %1323 = vmatprep.subr.bf16.mxu0 0
      %1324 = vmatpush1.bf16.msra.mxu0 0
      %1325 = vmatprep.subr.bf16.mxu0 0
      %1326 = vmatpush1.bf16.msra.mxu0 0
      %1327 = vmatprep.subr.bf16.mxu0 0
      %1328 = vmatpush1.bf16.msra.mxu0 0
      %1329 = vmatprep.mubr.bf16.mxu0 0
      %1330 = vmatmul.mubr.bf16.gmra.mrb[0].mxu0 %v1247
      %v1331 = vpop.f32.mrb[0].mxu0
      %v1332 = vadd.f32 0.0, %v1331
      %v1333 = vpop.f32.mrb[0].mxu0
      %v1334 = vpop.f32.mrb[0].mxu0
      %v1335 = vadd.f32 0.0, %v1334
      %v1336 = vpop.f32.mrb[0].mxu0
      %1337 = vmatprep.mubr.bf16.mxu0 0
      %1338 = vmatmul.mubr.bf16.gmra.mrb[0].mxu0 %v1250
      %v1339 = vpop.f32.mrb[0].mxu0
      %v1340 = vadd.f32 0.0, %v1339
      %v1341 = vpop.f32.mrb[0].mxu0
      %v1342 = vpop.f32.mrb[0].mxu0
      %v1343 = vadd.f32 0.0, %v1342
      %v1344 = vpop.f32.mrb[0].mxu0
      %1345 = vmatprep.mubr.bf16.mxu0 0
      %1346 = vmatmul.mubr.bf16.gmra.mrb[0].mxu0 %v1253
      %v1347 = vpop.f32.mrb[0].mxu0
      %v1348 = vadd.f32 0.0, %v1347
      %v1349 = vpop.f32.mrb[0].mxu0
      %v1350 = vpop.f32.mrb[0].mxu0
      %v1351 = vadd.f32 0.0, %v1350
      %v1352 = vpop.f32.mrb[0].mxu0
      %1353 = vmatprep.mubr.bf16.mxu0 0
      %1354 = vmatmul.mubr.bf16.gmra.mrb[0].mxu0 %v1256
      %v1355 = vpop.f32.mrb[0].mxu0
      %v1356 = vadd.f32 0.0, %v1355
      %v1357 = vpop.f32.mrb[0].mxu0
      %v1358 = vpop.f32.mrb[0].mxu0
      %v1359 = vadd.f32 0.0, %v1358
      %v1360 = vpop.f32.mrb[0].mxu0
      %1361 = vmatprep.mubr.bf16.mxu0 0
      %1362 = vmatmul.mubr.bf16.gmra.mrb[0].mxu0 %v1259
      %v1363 = vpop.f32.mrb[0].mxu0
      %v1364 = vadd.f32 0.0, %v1363
      %v1365 = vpop.f32.mrb[0].mxu0
      %v1366 = vpop.f32.mrb[0].mxu0
      %v1367 = vadd.f32 0.0, %v1366
      %v1368 = vpop.f32.mrb[0].mxu0
      %1369 = vmatprep.mubr.bf16.mxu0 0
      %1370 = vmatmul.mubr.bf16.gmra.mrb[0].mxu0 %v1262
      %v1371 = vpop.f32.mrb[0].mxu0
      %v1372 = vadd.f32 0.0, %v1371
      %v1373 = vpop.f32.mrb[0].mxu0
      %v1374 = vpop.f32.mrb[0].mxu0
      %v1375 = vadd.f32 0.0, %v1374
      %v1376 = vpop.f32.mrb[0].mxu0
      %1377 = vmatprep.mubr.bf16.mxu0 0
      %1378 = vmatmul.mubr.bf16.gmra.mrb[0].mxu0 %v1265
      %v1379 = vpop.f32.mrb[0].mxu0
      %v1380 = vadd.f32 0.0, %v1379
      %v1381 = vpop.f32.mrb[0].mxu0
      %v1382 = vpop.f32.mrb[0].mxu0
      %v1383 = vadd.f32 0.0, %v1382
      %v1384 = vpop.f32.mrb[0].mxu0
      %1385 = vmatprep.mubr.bf16.mxu0 0
      %1386 = vmatmul.mubr.bf16.gmra.mrb[0].mxu0 %v1268
      %v1387 = vpop.f32.mrb[0].mxu0
      %v1388 = vadd.f32 0.0, %v1387
      %v1389 = vpop.f32.mrb[0].mxu0
      %v1390 = vpop.f32.mrb[0].mxu0
      %v1391 = vadd.f32 0.0, %v1390
      %v1392 = vpop.f32.mrb[0].mxu0
      %1393 = vmatprep.mubr.bf16.mxu0 0
      %1394 = vmatmul.mubr.bf16.gmra.mrb[0].mxu0 %v1271
      %v1395 = vpop.f32.mrb[0].mxu0
      %v1396 = vadd.f32 0.0, %v1395
      %v1397 = vpop.f32.mrb[0].mxu0
      %v1398 = vpop.f32.mrb[0].mxu0
      %v1399 = vadd.f32 0.0, %v1398
      %v1400 = vpop.f32.mrb[0].mxu0
      %1401 = vmatprep.mubr.bf16.mxu0 0
      %1402 = vmatmul.mubr.bf16.gmra.mrb[0].mxu0 %v1274
      %v1403 = vpop.f32.mrb[0].mxu0
      %v1404 = vadd.f32 0.0, %v1403
      %v1405 = vpop.f32.mrb[0].mxu0
      %v1406 = vpop.f32.mrb[0].mxu0
      %v1407 = vadd.f32 0.0, %v1406
      %v1408 = vpop.f32.mrb[0].mxu0
      %1409 = vmatprep.mubr.bf16.mxu0 0
      %1410 = vmatmul.mubr.bf16.gmra.mrb[0].mxu0 %v1277
      %v1411 = vpop.f32.mrb[0].mxu0
      %v1412 = vadd.f32 0.0, %v1411
      %v1413 = vpop.f32.mrb[0].mxu0
      %v1414 = vpop.f32.mrb[0].mxu0
      %v1415 = vadd.f32 0.0, %v1414
      %v1416 = vpop.f32.mrb[0].mxu0
      %1417 = vmatprep.mubr.bf16.mxu0 0
      %1418 = vmatmul.mubr.bf16.gmra.mrb[0].mxu0 %v1280
      %v1419 = vpop.f32.mrb[0].mxu0
      %v1420 = vadd.f32 0.0, %v1419
      %v1421 = vpop.f32.mrb[0].mxu0
      %v1422 = vpop.f32.mrb[0].mxu0
      %v1423 = vadd.f32 0.0, %v1422
      %v1424 = vpop.f32.mrb[0].mxu0
      %1425 = vmatprep.mubr.bf16.mxu0 0
      %1426 = vmatmul.mubr.bf16.gmra.mrb[0].mxu0 %v1283
      %v1427 = vpop.f32.mrb[0].mxu0
      %v1428 = vadd.f32 0.0, %v1427
      %v1429 = vpop.f32.mrb[0].mxu0
      %v1430 = vpop.f32.mrb[0].mxu0
      %v1431 = vadd.f32 0.0, %v1430
      %v1432 = vpop.f32.mrb[0].mxu0
      %1433 = vmatprep.mubr.bf16.mxu0 0
      %1434 = vmatmul.mubr.bf16.gmra.mrb[0].mxu0 %v1286
      %v1435 = vpop.f32.mrb[0].mxu0
      %v1436 = vadd.f32 0.0, %v1435
      %v1437 = vpop.f32.mrb[0].mxu0
      %v1438 = vpop.f32.mrb[0].mxu0
      %v1439 = vadd.f32 0.0, %v1438
      %v1440 = vpop.f32.mrb[0].mxu0
      %1441 = vmatprep.mubr.bf16.mxu0 0
      %1442 = vmatmul.mubr.bf16.gmra.mrb[0].mxu0 %v1289
      %v1443 = vpop.f32.mrb[0].mxu0
      %v1444 = vadd.f32 0.0, %v1443
      %v1445 = vpop.f32.mrb[0].mxu0
      %v1446 = vpop.f32.mrb[0].mxu0
      %v1447 = vadd.f32 0.0, %v1446
      %v1448 = vpop.f32.mrb[0].mxu0
      %1449 = vmatprep.mubr.bf16.mxu0 0
      %1450 = vmatmul.mubr.bf16.gmra.mrb[0].mxu0 %v1292
      %v1451 = vpop.f32.mrb[0].mxu0
      %v1452 = vadd.f32 0.0, %v1451
      %v1453 = vpop.f32.mrb[0].mxu0
      %v1454 = vpop.f32.mrb[0].mxu0
      %v1455 = vadd.f32 0.0, %v1454
      %v1456 = vpop.f32.mrb[0].mxu0
      %1457 = vdwg.mxu0
      %v1458 = vadd.f32 %v1206, %v1332
      %v1459 = vadd.f32 %v1207, %v1335
      %v1460 = vadd.f32 %v1208, %v1340
      %v1461 = vadd.f32 %v1209, %v1343
      %v1462 = vadd.f32 %v1210, %v1348
      %v1463 = vadd.f32 %v1211, %v1351
      %v1464 = vadd.f32 %v1212, %v1356
      %v1465 = vadd.f32 %v1213, %v1359
      %v1466 = vadd.f32 %v1214, %v1364
      %v1467 = vadd.f32 %v1215, %v1367
      %v1468 = vadd.f32 %v1216, %v1372
      %v1469 = vadd.f32 %v1217, %v1375
      %v1470 = vadd.f32 %v1218, %v1380
      %v1471 = vadd.f32 %v1219, %v1383
      %v1472 = vadd.f32 %v1220, %v1388
      %v1473 = vadd.f32 %v1221, %v1391
      %v1474 = vadd.f32 %v1222, %v1396
      %v1475 = vadd.f32 %v1223, %v1399
      %v1476 = vadd.f32 %v1224, %v1404
      %v1477 = vadd.f32 %v1225, %v1407
      %v1478 = vadd.f32 %v1226, %v1412
      %v1479 = vadd.f32 %v1227, %v1415
      %v1480 = vadd.f32 %v1228, %v1420
      %v1481 = vadd.f32 %v1229, %v1423
      %v1482 = vadd.f32 %v1230, %v1428
      %v1483 = vadd.f32 %v1231, %v1431
      %v1484 = vadd.f32 %v1232, %v1436
      %v1485 = vadd.f32 %v1233, %v1439
      %v1486 = vadd.f32 %v1234, %v1444
      %v1487 = vadd.f32 %v1235, %v1447
      %v1488 = vadd.f32 %v1236, %v1452
      %v1489 = vadd.f32 %v1237, %v1455
      %1490 = vst.msk [vmem:[#allocation3] sm:$0xff] %vm1157, %v1458
      %1491 = vst.msk [vmem:[#allocation3 + $0x8] sm:$0xff] %vm1157, %v1459
      %1492 = vst.msk [vmem:[#allocation3 + $0x10] sm:$0xff] %vm1157, %v1460
      %1493 = vst.msk [vmem:[#allocation3 + $0x18] sm:$0xff] %vm1157, %v1461
      %1494 = vst.msk [vmem:[#allocation3 + $0x20] sm:$0xff] %vm1157, %v1462
      %1495 = vst.msk [vmem:[#allocation3 + $0x28] sm:$0xff] %vm1157, %v1463
      %1496 = vst.msk [vmem:[#allocation3 + $0x30] sm:$0xff] %vm1157, %v1464
      %1497 = vst.msk [vmem:[#allocation3 + $0x38] sm:$0xff] %vm1157, %v1465
      %1498 = vst.msk [vmem:[#allocation3 + $0x40] sm:$0xff] %vm1157, %v1466
      %1499 = vst.msk [vmem:[#allocation3 + $0x48] sm:$0xff] %vm1157, %v1467
      %1500 = vst.msk [vmem:[#allocation3 + $0x50] sm:$0xff] %vm1157, %v1468
      %1501 = vst.msk [vmem:[#allocation3 + $0x58] sm:$0xff] %vm1157, %v1469
      %1502 = vst.msk [vmem:[#allocation3 + $0x60] sm:$0xff] %vm1157, %v1470
      %1503 = vst.msk [vmem:[#allocation3 + $0x68] sm:$0xff] %vm1157, %v1471
      %1504 = vst.msk [vmem:[#allocation3 + $0x70] sm:$0xff] %vm1157, %v1472
      %1505 = vst.msk [vmem:[#allocation3 + $0x78] sm:$0xff] %vm1157, %v1473
      %1506 = vst.msk [vmem:[#allocation3 + $0x80] sm:$0xff] %vm1157, %v1474
      %1507 = vst.msk [vmem:[#allocation3 + $0x88] sm:$0xff] %vm1157, %v1475
      %1508 = vst.msk [vmem:[#allocation3 + $0x90] sm:$0xff] %vm1157, %v1476
      %1509 = vst.msk [vmem:[#allocation3 + $0x98] sm:$0xff] %vm1157, %v1477
      %1510 = vst.msk [vmem:[#allocation3 + $0xa0] sm:$0xff] %vm1157, %v1478
      %1511 = vst.msk [vmem:[#allocation3 + $0xa8] sm:$0xff] %vm1157, %v1479
      %1512 = vst.msk [vmem:[#allocation3 + $0xb0] sm:$0xff] %vm1157, %v1480
      %1513 = vst.msk [vmem:[#allocation3 + $0xb8] sm:$0xff] %vm1157, %v1481
      %1514 = vst.msk [vmem:[#allocation3 + $0xc0] sm:$0xff] %vm1157, %v1482
      %1515 = vst.msk [vmem:[#allocation3 + $0xc8] sm:$0xff] %vm1157, %v1483
      %1516 = vst.msk [vmem:[#allocation3 + $0xd0] sm:$0xff] %vm1157, %v1484
      %1517 = vst.msk [vmem:[#allocation3 + $0xd8] sm:$0xff] %vm1157, %v1485
      %1518 = vst.msk [vmem:[#allocation3 + $0xe0] sm:$0xff] %vm1157, %v1486
      %1519 = vst.msk [vmem:[#allocation3 + $0xe8] sm:$0xff] %vm1157, %v1487
      %1520 = vst.msk [vmem:[#allocation3 + $0xf0] sm:$0xff] %vm1157, %v1488
      %1521 = vst.msk [vmem:[#allocation3 + $0xf8] sm:$0xff] %vm1157, %v1489
      %s1522 = scalar_lea.vmem [#allocation2], 16
      %v1523 = vld [vmem:[%s1522] sm:$0xff]
      %v1524 = vld [vmem:[%s1522 + $0x8] sm:$0xff]
      %v1525 = vld [vmem:[%s1522 + $0x10] sm:$0xff]
      %v1526 = vld [vmem:[%s1522 + $0x18] sm:$0xff]
      %v1527 = vld [vmem:[%s1522 + $0x20] sm:$0xff]
      %v1528 = vld [vmem:[%s1522 + $0x28] sm:$0xff]
      %v1529 = vld [vmem:[%s1522 + $0x30] sm:$0xff]
      %v1530 = vld [vmem:[%s1522 + $0x38] sm:$0xff]
      %v1531 = vld [vmem:[%s1522 + $0x40] sm:$0xff]
      %v1532 = vld [vmem:[%s1522 + $0x48] sm:$0xff]
      %v1533 = vld [vmem:[%s1522 + $0x50] sm:$0xff]
      %v1534 = vld [vmem:[%s1522 + $0x58] sm:$0xff]
      %v1535 = vld [vmem:[%s1522 + $0x60] sm:$0xff]
      %v1536 = vld [vmem:[%s1522 + $0x68] sm:$0xff]
      %v1537 = vld [vmem:[%s1522 + $0x70] sm:$0xff]
      %v1538 = vld [vmem:[%s1522 + $0x78] sm:$0xff]
      %v1539 = vld [vmem:[#allocation3] sm:$0xff]
      %v1540 = vld [vmem:[#allocation3 + $0x8] sm:$0xff]
      %v1541 = vld [vmem:[#allocation3 + $0x10] sm:$0xff]
      %v1542 = vld [vmem:[#allocation3 + $0x18] sm:$0xff]
      %v1543 = vld [vmem:[#allocation3 + $0x20] sm:$0xff]
      %v1544 = vld [vmem:[#allocation3 + $0x28] sm:$0xff]
      %v1545 = vld [vmem:[#allocation3 + $0x30] sm:$0xff]
      %v1546 = vld [vmem:[#allocation3 + $0x38] sm:$0xff]
      %v1547 = vld [vmem:[#allocation3 + $0x40] sm:$0xff]
      %v1548 = vld [vmem:[#allocation3 + $0x48] sm:$0xff]
      %v1549 = vld [vmem:[#allocation3 + $0x50] sm:$0xff]
      %v1550 = vld [vmem:[#allocation3 + $0x58] sm:$0xff]
      %v1551 = vld [vmem:[#allocation3 + $0x60] sm:$0xff]
      %v1552 = vld [vmem:[#allocation3 + $0x68] sm:$0xff]
      %v1553 = vld [vmem:[#allocation3 + $0x70] sm:$0xff]
      %v1554 = vld [vmem:[#allocation3 + $0x78] sm:$0xff]
      %v1555 = vld [vmem:[#allocation3 + $0x80] sm:$0xff]
      %v1556 = vld [vmem:[#allocation3 + $0x88] sm:$0xff]
      %v1557 = vld [vmem:[#allocation3 + $0x90] sm:$0xff]
      %v1558 = vld [vmem:[#allocation3 + $0x98] sm:$0xff]
      %v1559 = vld [vmem:[#allocation3 + $0xa0] sm:$0xff]
      %v1560 = vld [vmem:[#allocation3 + $0xa8] sm:$0xff]
      %v1561 = vld [vmem:[#allocation3 + $0xb0] sm:$0xff]
      %v1562 = vld [vmem:[#allocation3 + $0xb8] sm:$0xff]
      %v1563 = vld [vmem:[#allocation3 + $0xc0] sm:$0xff]
      %v1564 = vld [vmem:[#allocation3 + $0xc8] sm:$0xff]
      %v1565 = vld [vmem:[#allocation3 + $0xd0] sm:$0xff]
      %v1566 = vld [vmem:[#allocation3 + $0xd8] sm:$0xff]
      %v1567 = vld [vmem:[#allocation3 + $0xe0] sm:$0xff]
      %v1568 = vld [vmem:[#allocation3 + $0xe8] sm:$0xff]
      %v1569 = vld [vmem:[#allocation3 + $0xf0] sm:$0xff]
      %v1570 = vld [vmem:[#allocation3 + $0xf8] sm:$0xff]
      %s1571 = scalar_lea.vmem %s3, 16
      %v1572 = vld [vmem:[%s1571] sm:$0xf]
      %v1573 = vld [vmem:[%s1571 + $0x4] sm:$0x3]
      %v1576 = vunpack.c.l.b16 %v1572
      %v1577 = vunpack.c.l.b16 %v1573
      %v1578 = vpack.c.b16 %v1577, %v1576
      %v1580 = vsel %vm235, %v1523, 0
      %v1583 = vsel %vm235, %v1524, 0
      %v1586 = vsel %vm235, %v1525, 0
      %v1589 = vsel %vm235, %v1526, 0
      %v1592 = vsel %vm235, %v1527, 0
      %v1595 = vsel %vm235, %v1528, 0
      %v1598 = vsel %vm235, %v1529, 0
      %v1601 = vsel %vm235, %v1530, 0
      %v1604 = vsel %vm235, %v1531, 0
      %v1607 = vsel %vm235, %v1532, 0
      %v1610 = vsel %vm235, %v1533, 0
      %v1613 = vsel %vm235, %v1534, 0
      %v1616 = vsel %vm235, %v1535, 0
      %v1619 = vsel %vm235, %v1536, 0
      %v1622 = vsel %vm235, %v1537, 0
      %v1625 = vsel %vm235, %v1538, 0
      %v1628 = vsel %vm960, %v1578, 0
      %1630 = vmatprep.subr.bf16.mxu0 0
      %1631 = vmatpush1.bf16.msra.mxu0 %v1628
      %1632 = vmatprep.subr.bf16.mxu0 0
      %1633 = vmatpush1.bf16.msra.mxu0 0
      %1634 = vmatprep.subr.bf16.mxu0 0
      %1635 = vmatpush1.bf16.msra.mxu0 0
      %1636 = vmatprep.subr.bf16.mxu0 0
      %1637 = vmatpush1.bf16.msra.mxu0 0
      %1638 = vmatprep.subr.bf16.mxu0 0
      %1639 = vmatpush1.bf16.msra.mxu0 0
      %1640 = vmatprep.subr.bf16.mxu0 0
      %1641 = vmatpush1.bf16.msra.mxu0 0
      %1642 = vmatprep.subr.bf16.mxu0 0
      %1643 = vmatpush1.bf16.msra.mxu0 0
      %1644 = vmatprep.subr.bf16.mxu0 0
      %1645 = vmatpush1.bf16.msra.mxu0 0
      %1646 = vmatprep.subr.bf16.mxu0 0
      %1647 = vmatpush1.bf16.msra.mxu0 0
      %1648 = vmatprep.subr.bf16.mxu0 0
      %1649 = vmatpush1.bf16.msra.mxu0 0
      %1650 = vmatprep.subr.bf16.mxu0 0
      %1651 = vmatpush1.bf16.msra.mxu0 0
      %1652 = vmatprep.subr.bf16.mxu0 0
      %1653 = vmatpush1.bf16.msra.mxu0 0
      %1654 = vmatprep.subr.bf16.mxu0 0
      %1655 = vmatpush1.bf16.msra.mxu0 0
      %1656 = vmatprep.subr.bf16.mxu0 0
      %1657 = vmatpush1.bf16.msra.mxu0 0
      %1658 = vmatprep.subr.bf16.mxu0 0
      %1659 = vmatpush1.bf16.msra.mxu0 0
      %1660 = vmatprep.subr.bf16.mxu0 0
      %1661 = vmatpush1.bf16.msra.mxu0 0
      %1662 = vmatprep.mubr.bf16.mxu0 0
      %1663 = vmatmul.mubr.bf16.gmra.mrb[0].mxu0 %v1580
      %v1664 = vpop.f32.mrb[0].mxu0
      %v1665 = vadd.f32 0.0, %v1664
      %v1666 = vpop.f32.mrb[0].mxu0
      %v1667 = vpop.f32.mrb[0].mxu0
      %v1668 = vadd.f32 0.0, %v1667
      %v1669 = vpop.f32.mrb[0].mxu0
      %1670 = vmatprep.mubr.bf16.mxu0 0
      %1671 = vmatmul.mubr.bf16.gmra.mrb[0].mxu0 %v1583
      %v1672 = vpop.f32.mrb[0].mxu0
      %v1673 = vadd.f32 0.0, %v1672
      %v1674 = vpop.f32.mrb[0].mxu0
      %v1675 = vpop.f32.mrb[0].mxu0
      %v1676 = vadd.f32 0.0, %v1675
      %v1677 = vpop.f32.mrb[0].mxu0
      %1678 = vmatprep.mubr.bf16.mxu0 0
      %1679 = vmatmul.mubr.bf16.gmra.mrb[0].mxu0 %v1586
      %v1680 = vpop.f32.mrb[0].mxu0
      %v1681 = vadd.f32 0.0, %v1680
      %v1682 = vpop.f32.mrb[0].mxu0
      %v1683 = vpop.f32.mrb[0].mxu0
      %v1684 = vadd.f32 0.0, %v1683
      %v1685 = vpop.f32.mrb[0].mxu0
      %1686 = vmatprep.mubr.bf16.mxu0 0
      %1687 = vmatmul.mubr.bf16.gmra.mrb[0].mxu0 %v1589
      %v1688 = vpop.f32.mrb[0].mxu0
      %v1689 = vadd.f32 0.0, %v1688
      %v1690 = vpop.f32.mrb[0].mxu0
      %v1691 = vpop.f32.mrb[0].mxu0
      %v1692 = vadd.f32 0.0, %v1691
      %v1693 = vpop.f32.mrb[0].mxu0
      %1694 = vmatprep.mubr.bf16.mxu0 0
      %1695 = vmatmul.mubr.bf16.gmra.mrb[0].mxu0 %v1592
      %v1696 = vpop.f32.mrb[0].mxu0
      %v1697 = vadd.f32 0.0, %v1696
      %v1698 = vpop.f32.mrb[0].mxu0
      %v1699 = vpop.f32.mrb[0].mxu0
      %v1700 = vadd.f32 0.0, %v1699
      %v1701 = vpop.f32.mrb[0].mxu0
      %1702 = vmatprep.mubr.bf16.mxu0 0
      %1703 = vmatmul.mubr.bf16.gmra.mrb[0].mxu0 %v1595
      %v1704 = vpop.f32.mrb[0].mxu0
      %v1705 = vadd.f32 0.0, %v1704
      %v1706 = vpop.f32.mrb[0].mxu0
      %v1707 = vpop.f32.mrb[0].mxu0
      %v1708 = vadd.f32 0.0, %v1707
      %v1709 = vpop.f32.mrb[0].mxu0
      %1710 = vmatprep.mubr.bf16.mxu0 0
      %1711 = vmatmul.mubr.bf16.gmra.mrb[0].mxu0 %v1598
      %v1712 = vpop.f32.mrb[0].mxu0
      %v1713 = vadd.f32 0.0, %v1712
      %v1714 = vpop.f32.mrb[0].mxu0
      %v1715 = vpop.f32.mrb[0].mxu0
      %v1716 = vadd.f32 0.0, %v1715
      %v1717 = vpop.f32.mrb[0].mxu0
      %1718 = vmatprep.mubr.bf16.mxu0 0
      %1719 = vmatmul.mubr.bf16.gmra.mrb[0].mxu0 %v1601
      %v1720 = vpop.f32.mrb[0].mxu0
      %v1721 = vadd.f32 0.0, %v1720
      %v1722 = vpop.f32.mrb[0].mxu0
      %v1723 = vpop.f32.mrb[0].mxu0
      %v1724 = vadd.f32 0.0, %v1723
      %v1725 = vpop.f32.mrb[0].mxu0
      %1726 = vmatprep.mubr.bf16.mxu0 0
      %1727 = vmatmul.mubr.bf16.gmra.mrb[0].mxu0 %v1604
      %v1728 = vpop.f32.mrb[0].mxu0
      %v1729 = vadd.f32 0.0, %v1728
      %v1730 = vpop.f32.mrb[0].mxu0
      %v1731 = vpop.f32.mrb[0].mxu0
      %v1732 = vadd.f32 0.0, %v1731
      %v1733 = vpop.f32.mrb[0].mxu0
      %1734 = vmatprep.mubr.bf16.mxu0 0
      %1735 = vmatmul.mubr.bf16.gmra.mrb[0].mxu0 %v1607
      %v1736 = vpop.f32.mrb[0].mxu0
      %v1737 = vadd.f32 0.0, %v1736
      %v1738 = vpop.f32.mrb[0].mxu0
      %v1739 = vpop.f32.mrb[0].mxu0
      %v1740 = vadd.f32 0.0, %v1739
      %v1741 = vpop.f32.mrb[0].mxu0
      %1742 = vmatprep.mubr.bf16.mxu0 0
      %1743 = vmatmul.mubr.bf16.gmra.mrb[0].mxu0 %v1610
      %v1744 = vpop.f32.mrb[0].mxu0
      %v1745 = vadd.f32 0.0, %v1744
      %v1746 = vpop.f32.mrb[0].mxu0
      %v1747 = vpop.f32.mrb[0].mxu0
      %v1748 = vadd.f32 0.0, %v1747
      %v1749 = vpop.f32.mrb[0].mxu0
      %1750 = vmatprep.mubr.bf16.mxu0 0
      %1751 = vmatmul.mubr.bf16.gmra.mrb[0].mxu0 %v1613
      %v1752 = vpop.f32.mrb[0].mxu0
      %v1753 = vadd.f32 0.0, %v1752
      %v1754 = vpop.f32.mrb[0].mxu0
      %v1755 = vpop.f32.mrb[0].mxu0
      %v1756 = vadd.f32 0.0, %v1755
      %v1757 = vpop.f32.mrb[0].mxu0
      %1758 = vmatprep.mubr.bf16.mxu0 0
      %1759 = vmatmul.mubr.bf16.gmra.mrb[0].mxu0 %v1616
      %v1760 = vpop.f32.mrb[0].mxu0
      %v1761 = vadd.f32 0.0, %v1760
      %v1762 = vpop.f32.mrb[0].mxu0
      %v1763 = vpop.f32.mrb[0].mxu0
      %v1764 = vadd.f32 0.0, %v1763
      %v1765 = vpop.f32.mrb[0].mxu0
      %1766 = vmatprep.mubr.bf16.mxu0 0
      %1767 = vmatmul.mubr.bf16.gmra.mrb[0].mxu0 %v1619
      %v1768 = vpop.f32.mrb[0].mxu0
      %v1769 = vadd.f32 0.0, %v1768
      %v1770 = vpop.f32.mrb[0].mxu0
      %v1771 = vpop.f32.mrb[0].mxu0
      %v1772 = vadd.f32 0.0, %v1771
      %v1773 = vpop.f32.mrb[0].mxu0
      %1774 = vmatprep.mubr.bf16.mxu0 0
      %1775 = vmatmul.mubr.bf16.gmra.mrb[0].mxu0 %v1622
      %v1776 = vpop.f32.mrb[0].mxu0
      %v1777 = vadd.f32 0.0, %v1776
      %v1778 = vpop.f32.mrb[0].mxu0
      %v1779 = vpop.f32.mrb[0].mxu0
      %v1780 = vadd.f32 0.0, %v1779
      %v1781 = vpop.f32.mrb[0].mxu0
      %1782 = vmatprep.mubr.bf16.mxu0 0
      %1783 = vmatmul.mubr.bf16.gmra.mrb[0].mxu0 %v1625
      %v1784 = vpop.f32.mrb[0].mxu0
      %v1785 = vadd.f32 0.0, %v1784
      %v1786 = vpop.f32.mrb[0].mxu0
      %v1787 = vpop.f32.mrb[0].mxu0
      %v1788 = vadd.f32 0.0, %v1787
      %v1789 = vpop.f32.mrb[0].mxu0
      %1790 = vdwg.mxu0
      %v1791 = vadd.f32 %v1539, %v1665
      %v1792 = vadd.f32 %v1540, %v1668
      %v1793 = vadd.f32 %v1541, %v1673
      %v1794 = vadd.f32 %v1542, %v1676
      %v1795 = vadd.f32 %v1543, %v1681
      %v1796 = vadd.f32 %v1544, %v1684
      %v1797 = vadd.f32 %v1545, %v1689
      %v1798 = vadd.f32 %v1546, %v1692
      %v1799 = vadd.f32 %v1547, %v1697
      %v1800 = vadd.f32 %v1548, %v1700
      %v1801 = vadd.f32 %v1549, %v1705
      %v1802 = vadd.f32 %v1550, %v1708
      %v1803 = vadd.f32 %v1551, %v1713
      %v1804 = vadd.f32 %v1552, %v1716
      %v1805 = vadd.f32 %v1553, %v1721
      %v1806 = vadd.f32 %v1554, %v1724
      %v1807 = vadd.f32 %v1555, %v1729
      %v1808 = vadd.f32 %v1556, %v1732
      %v1809 = vadd.f32 %v1557, %v1737
      %v1810 = vadd.f32 %v1558, %v1740
      %v1811 = vadd.f32 %v1559, %v1745
      %v1812 = vadd.f32 %v1560, %v1748
      %v1813 = vadd.f32 %v1561, %v1753
      %v1814 = vadd.f32 %v1562, %v1756
      %v1815 = vadd.f32 %v1563, %v1761
      %v1816 = vadd.f32 %v1564, %v1764
      %v1817 = vadd.f32 %v1565, %v1769
      %v1818 = vadd.f32 %v1566, %v1772
      %v1819 = vadd.f32 %v1567, %v1777
      %v1820 = vadd.f32 %v1568, %v1780
      %v1821 = vadd.f32 %v1569, %v1785
      %v1822 = vadd.f32 %v1570, %v1788
      %1823 = vst.msk [vmem:[#allocation3] sm:$0xff] %vm1157, %v1791
      %1824 = vst.msk [vmem:[#allocation3 + $0x8] sm:$0xff] %vm1157, %v1792
      %1825 = vst.msk [vmem:[#allocation3 + $0x10] sm:$0xff] %vm1157, %v1793
      %1826 = vst.msk [vmem:[#allocation3 + $0x18] sm:$0xff] %vm1157, %v1794
      %1827 = vst.msk [vmem:[#allocation3 + $0x20] sm:$0xff] %vm1157, %v1795
      %1828 = vst.msk [vmem:[#allocation3 + $0x28] sm:$0xff] %vm1157, %v1796
      %1829 = vst.msk [vmem:[#allocation3 + $0x30] sm:$0xff] %vm1157, %v1797
      %1830 = vst.msk [vmem:[#allocation3 + $0x38] sm:$0xff] %vm1157, %v1798
      %1831 = vst.msk [vmem:[#allocation3 + $0x40] sm:$0xff] %vm1157, %v1799
      %1832 = vst.msk [vmem:[#allocation3 + $0x48] sm:$0xff] %vm1157, %v1800
      %1833 = vst.msk [vmem:[#allocation3 + $0x50] sm:$0xff] %vm1157, %v1801
      %1834 = vst.msk [vmem:[#allocation3 + $0x58] sm:$0xff] %vm1157, %v1802
      %1835 = vst.msk [vmem:[#allocation3 + $0x60] sm:$0xff] %vm1157, %v1803
      %1836 = vst.msk [vmem:[#allocation3 + $0x68] sm:$0xff] %vm1157, %v1804
      %1837 = vst.msk [vmem:[#allocation3 + $0x70] sm:$0xff] %vm1157, %v1805
      %1838 = vst.msk [vmem:[#allocation3 + $0x78] sm:$0xff] %vm1157, %v1806
      %1839 = vst.msk [vmem:[#allocation3 + $0x80] sm:$0xff] %vm1157, %v1807
      %1840 = vst.msk [vmem:[#allocation3 + $0x88] sm:$0xff] %vm1157, %v1808
      %1841 = vst.msk [vmem:[#allocation3 + $0x90] sm:$0xff] %vm1157, %v1809
      %1842 = vst.msk [vmem:[#allocation3 + $0x98] sm:$0xff] %vm1157, %v1810
      %1843 = vst.msk [vmem:[#allocation3 + $0xa0] sm:$0xff] %vm1157, %v1811
      %1844 = vst.msk [vmem:[#allocation3 + $0xa8] sm:$0xff] %vm1157, %v1812
      %1845 = vst.msk [vmem:[#allocation3 + $0xb0] sm:$0xff] %vm1157, %v1813
      %1846 = vst.msk [vmem:[#allocation3 + $0xb8] sm:$0xff] %vm1157, %v1814
      %1847 = vst.msk [vmem:[#allocation3 + $0xc0] sm:$0xff] %vm1157, %v1815
      %1848 = vst.msk [vmem:[#allocation3 + $0xc8] sm:$0xff] %vm1157, %v1816
      %1849 = vst.msk [vmem:[#allocation3 + $0xd0] sm:$0xff] %vm1157, %v1817
      %1850 = vst.msk [vmem:[#allocation3 + $0xd8] sm:$0xff] %vm1157, %v1818
      %1851 = vst.msk [vmem:[#allocation3 + $0xe0] sm:$0xff] %vm1157, %v1819
      %1852 = vst.msk [vmem:[#allocation3 + $0xe8] sm:$0xff] %vm1157, %v1820
      %1853 = vst.msk [vmem:[#allocation3 + $0xf0] sm:$0xff] %vm1157, %v1821
      %1854 = vst.msk [vmem:[#allocation3 + $0xf8] sm:$0xff] %vm1157, %v1822
      %vm1855 = vcmask 31744
      %1856 = vst.msk [vmem:[%s224] sm:$0xff] %vm1855, %v342
      %1857 = vst.msk [vmem:[%s224 + $0x8] sm:$0xff] %vm1855, %v343
      %1858 = vst.msk [vmem:[%s224 + $0x10] sm:$0xff] %vm1855, %v344
      %1859 = vst.msk [vmem:[%s224 + $0x18] sm:$0xff] %vm1855, %v345
      %1860 = vst.msk [vmem:[%s224 + $0x20] sm:$0xff] %vm1855, %v346
      %1861 = vst.msk [vmem:[%s224 + $0x28] sm:$0xff] %vm1855, %v347
      %1862 = vst.msk [vmem:[%s224 + $0x30] sm:$0xff] %vm1855, %v348
      %1863 = vst.msk [vmem:[%s224 + $0x38] sm:$0xff] %vm1855, %v349
      %1864 = vst.msk [vmem:[%s224 + $0x40] sm:$0xff] %vm1855, %v350
      %1865 = vst.msk [vmem:[%s224 + $0x48] sm:$0xff] %vm1855, %v351
      %1866 = vst.msk [vmem:[%s224 + $0x50] sm:$0xff] %vm1855, %v352
      %1867 = vst.msk [vmem:[%s224 + $0x58] sm:$0xff] %vm1855, %v353
      %1868 = vst.msk [vmem:[%s224 + $0x60] sm:$0xff] %vm1855, %v354
      %1869 = vst.msk [vmem:[%s224 + $0x68] sm:$0xff] %vm1855, %v355
      %1870 = vst.msk [vmem:[%s224 + $0x70] sm:$0xff] %vm1855, %v356
      %1871 = vst.msk [vmem:[%s224 + $0x78] sm:$0xff] %vm1855, %v357
      %1872 = vst.msk [vmem:[%s224 + $0x80] sm:$0xff] %vm1855, %v358
      %1873 = vst.msk [vmem:[%s224 + $0x88] sm:$0xff] %vm1855, %v359
      %1874 = vst.msk [vmem:[%s224 + $0x90] sm:$0xff] %vm1855, %v360
      %1875 = vst.msk [vmem:[%s224 + $0x98] sm:$0xff] %vm1855, %v361
      %1876 = vst.msk [vmem:[%s224 + $0xa0] sm:$0xff] %vm1855, %v362
      %1877 = vst.msk [vmem:[%s224 + $0xa8] sm:$0xff] %vm1855, %v363
      %1878 = vst.msk [vmem:[%s224 + $0xb0] sm:$0xff] %vm1855, %v364
      %1879 = vst.msk [vmem:[%s224 + $0xb8] sm:$0xff] %vm1855, %v365
      %1880 = vst.msk [vmem:[%s224 + $0xc0] sm:$0xff] %vm1855, %v366
      %1881 = vst.msk [vmem:[%s224 + $0xc8] sm:$0xff] %vm1855, %v367
      %1882 = vst.msk [vmem:[%s224 + $0xd0] sm:$0xff] %vm1855, %v368
      %1883 = vst.msk [vmem:[%s224 + $0xd8] sm:$0xff] %vm1855, %v369
      %1884 = vst.msk [vmem:[%s224 + $0xe0] sm:$0xff] %vm1855, %v370
      %1885 = vst.msk [vmem:[%s224 + $0xe8] sm:$0xff] %vm1855, %v371
      %1886 = vst.msk [vmem:[%s224 + $0xf0] sm:$0xff] %vm1855, %v372
      %1887 = vst.msk [vmem:[%s224 + $0xf8] sm:$0xff] %vm1855, %v373
      %v1888 = vld [vmem:[#allocation3] sm:$0xff]
      %v1889 = vld [vmem:[#allocation3 + $0x8] sm:$0xff]
      %v1890 = vld [vmem:[#allocation3 + $0x10] sm:$0xff]
      %v1891 = vld [vmem:[#allocation3 + $0x18] sm:$0xff]
      %v1892 = vld [vmem:[#allocation3 + $0x20] sm:$0xff]
      %v1893 = vld [vmem:[#allocation3 + $0x28] sm:$0xff]
      %v1894 = vld [vmem:[#allocation3 + $0x30] sm:$0xff]
      %v1895 = vld [vmem:[#allocation3 + $0x38] sm:$0xff]
      %v1896 = vld [vmem:[#allocation3 + $0x40] sm:$0xff]
      %v1897 = vld [vmem:[#allocation3 + $0x48] sm:$0xff]
      %v1898 = vld [vmem:[#allocation3 + $0x50] sm:$0xff]
      %v1899 = vld [vmem:[#allocation3 + $0x58] sm:$0xff]
      %v1900 = vld [vmem:[#allocation3 + $0x60] sm:$0xff]
      %v1901 = vld [vmem:[#allocation3 + $0x68] sm:$0xff]
      %v1902 = vld [vmem:[#allocation3 + $0x70] sm:$0xff]
      %v1903 = vld [vmem:[#allocation3 + $0x78] sm:$0xff]
      %v1904 = vld [vmem:[#allocation3 + $0x80] sm:$0xff]
      %v1905 = vld [vmem:[#allocation3 + $0x88] sm:$0xff]
      %v1906 = vld [vmem:[#allocation3 + $0x90] sm:$0xff]
      %v1907 = vld [vmem:[#allocation3 + $0x98] sm:$0xff]
      %v1908 = vld [vmem:[#allocation3 + $0xa0] sm:$0xff]
      %v1909 = vld [vmem:[#allocation3 + $0xa8] sm:$0xff]
      %v1910 = vld [vmem:[#allocation3 + $0xb0] sm:$0xff]
      %v1911 = vld [vmem:[#allocation3 + $0xb8] sm:$0xff]
      %v1912 = vld [vmem:[#allocation3 + $0xc0] sm:$0xff]
      %v1913 = vld [vmem:[#allocation3 + $0xc8] sm:$0xff]
      %v1914 = vld [vmem:[#allocation3 + $0xd0] sm:$0xff]
      %v1915 = vld [vmem:[#allocation3 + $0xd8] sm:$0xff]
      %v1916 = vld [vmem:[#allocation3 + $0xe0] sm:$0xff]
      %v1917 = vld [vmem:[#allocation3 + $0xe8] sm:$0xff]
      %v1918 = vld [vmem:[#allocation3 + $0xf0] sm:$0xff]
      %v1919 = vld [vmem:[#allocation3 + $0xf8] sm:$0xff]
      %1952 = vrot.lane.b32.xlu0 %v1888, 4
      %v1953 = vpop.permute.xlu0 %1952
      %1954 = vrot.lane.b32.xlu0 %v1889, 4
      %v1955 = vpop.permute.xlu0 %1954
      %1956 = vrot.lane.b32.xlu0 %v1890, 4
      %v1957 = vpop.permute.xlu0 %1956
      %1958 = vrot.lane.b32.xlu0 %v1891, 4
      %v1959 = vpop.permute.xlu0 %1958
      %1960 = vrot.lane.b32.xlu0 %v1892, 4
      %v1961 = vpop.permute.xlu0 %1960
      %1962 = vrot.lane.b32.xlu0 %v1893, 4
      %v1963 = vpop.permute.xlu0 %1962
      %1964 = vrot.lane.b32.xlu0 %v1894, 4
      %v1965 = vpop.permute.xlu0 %1964
      %1966 = vrot.lane.b32.xlu0 %v1895, 4
      %v1967 = vpop.permute.xlu0 %1966
      %1968 = vrot.lane.b32.xlu0 %v1896, 4
      %v1969 = vpop.permute.xlu0 %1968
      %1970 = vrot.lane.b32.xlu0 %v1897, 4
      %v1971 = vpop.permute.xlu0 %1970
      %1972 = vrot.lane.b32.xlu0 %v1898, 4
      %v1973 = vpop.permute.xlu0 %1972
      %1974 = vrot.lane.b32.xlu0 %v1899, 4
      %v1975 = vpop.permute.xlu0 %1974
      %1976 = vrot.lane.b32.xlu0 %v1900, 4
      %v1977 = vpop.permute.xlu0 %1976
      %1978 = vrot.lane.b32.xlu0 %v1901, 4
      %v1979 = vpop.permute.xlu0 %1978
      %1980 = vrot.lane.b32.xlu0 %v1902, 4
      %v1981 = vpop.permute.xlu0 %1980
      %1982 = vrot.lane.b32.xlu0 %v1903, 4
      %v1983 = vpop.permute.xlu0 %1982
      %1984 = vrot.lane.b32.xlu0 %v1904, 4
      %v1985 = vpop.permute.xlu0 %1984
      %1986 = vrot.lane.b32.xlu0 %v1905, 4
      %v1987 = vpop.permute.xlu0 %1986
      %1988 = vrot.lane.b32.xlu0 %v1906, 4
      %v1989 = vpop.permute.xlu0 %1988
      %1990 = vrot.lane.b32.xlu0 %v1907, 4
      %v1991 = vpop.permute.xlu0 %1990
      %1992 = vrot.lane.b32.xlu0 %v1908, 4
      %v1993 = vpop.permute.xlu0 %1992
      %1994 = vrot.lane.b32.xlu0 %v1909, 4
      %v1995 = vpop.permute.xlu0 %1994
      %1996 = vrot.lane.b32.xlu0 %v1910, 4
      %v1997 = vpop.permute.xlu0 %1996
      %1998 = vrot.lane.b32.xlu0 %v1911, 4
      %v1999 = vpop.permute.xlu0 %1998
      %2000 = vrot.lane.b32.xlu0 %v1912, 4
      %v2001 = vpop.permute.xlu0 %2000
      %2002 = vrot.lane.b32.xlu0 %v1913, 4
      %v2003 = vpop.permute.xlu0 %2002
      %2004 = vrot.lane.b32.xlu0 %v1914, 4
      %v2005 = vpop.permute.xlu0 %2004
      %2006 = vrot.lane.b32.xlu0 %v1915, 4
      %v2007 = vpop.permute.xlu0 %2006
      %2008 = vrot.lane.b32.xlu0 %v1916, 4
      %v2009 = vpop.permute.xlu0 %2008
      %2010 = vrot.lane.b32.xlu0 %v1917, 4
      %v2011 = vpop.permute.xlu0 %2010
      %2012 = vrot.lane.b32.xlu0 %v1918, 4
      %v2013 = vpop.permute.xlu0 %2012
      %2014 = vrot.lane.b32.xlu0 %v1919, 4
      %v2015 = vpop.permute.xlu0 %2014
      %vm2048 = vcmask 97312
      %2049 = vst.msk [vmem:[%s224] sm:$0xff] %vm2048, %v1953
      %2050 = vst.msk [vmem:[%s224 + $0x8] sm:$0xff] %vm2048, %v1955
      %2051 = vst.msk [vmem:[%s224 + $0x10] sm:$0xff] %vm2048, %v1957
      %2052 = vst.msk [vmem:[%s224 + $0x18] sm:$0xff] %vm2048, %v1959
      %2053 = vst.msk [vmem:[%s224 + $0x20] sm:$0xff] %vm2048, %v1961
      %2054 = vst.msk [vmem:[%s224 + $0x28] sm:$0xff] %vm2048, %v1963
      %2055 = vst.msk [vmem:[%s224 + $0x30] sm:$0xff] %vm2048, %v1965
      %2056 = vst.msk [vmem:[%s224 + $0x38] sm:$0xff] %vm2048, %v1967
      %2057 = vst.msk [vmem:[%s224 + $0x40] sm:$0xff] %vm2048, %v1969
      %2058 = vst.msk [vmem:[%s224 + $0x48] sm:$0xff] %vm2048, %v1971
      %2059 = vst.msk [vmem:[%s224 + $0x50] sm:$0xff] %vm2048, %v1973
      %2060 = vst.msk [vmem:[%s224 + $0x58] sm:$0xff] %vm2048, %v1975
      %2061 = vst.msk [vmem:[%s224 + $0x60] sm:$0xff] %vm2048, %v1977
      %2062 = vst.msk [vmem:[%s224 + $0x68] sm:$0xff] %vm2048, %v1979
      %2063 = vst.msk [vmem:[%s224 + $0x70] sm:$0xff] %vm2048, %v1981
      %2064 = vst.msk [vmem:[%s224 + $0x78] sm:$0xff] %vm2048, %v1983
      %2065 = vst.msk [vmem:[%s224 + $0x80] sm:$0xff] %vm2048, %v1985
      %2066 = vst.msk [vmem:[%s224 + $0x88] sm:$0xff] %vm2048, %v1987
      %2067 = vst.msk [vmem:[%s224 + $0x90] sm:$0xff] %vm2048, %v1989
      %2068 = vst.msk [vmem:[%s224 + $0x98] sm:$0xff] %vm2048, %v1991
      %2069 = vst.msk [vmem:[%s224 + $0xa0] sm:$0xff] %vm2048, %v1993
      %2070 = vst.msk [vmem:[%s224 + $0xa8] sm:$0xff] %vm2048, %v1995
      %2071 = vst.msk [vmem:[%s224 + $0xb0] sm:$0xff] %vm2048, %v1997
      %2072 = vst.msk [vmem:[%s224 + $0xb8] sm:$0xff] %vm2048, %v1999
      %2073 = vst.msk [vmem:[%s224 + $0xc0] sm:$0xff] %vm2048, %v2001
      %2074 = vst.msk [vmem:[%s224 + $0xc8] sm:$0xff] %vm2048, %v2003
      %2075 = vst.msk [vmem:[%s224 + $0xd0] sm:$0xff] %vm2048, %v2005
      %2076 = vst.msk [vmem:[%s224 + $0xd8] sm:$0xff] %vm2048, %v2007
      %2077 = vst.msk [vmem:[%s224 + $0xe0] sm:$0xff] %vm2048, %v2009
      %2078 = vst.msk [vmem:[%s224 + $0xe8] sm:$0xff] %vm2048, %v2011
      %2079 = vst.msk [vmem:[%s224 + $0xf0] sm:$0xff] %vm2048, %v2013
      %2080 = vst.msk [vmem:[%s224 + $0xf8] sm:$0xff] %vm2048, %v2015
      %p2081 = scmp.lt.s32.totalorder %s16, 1
      %s2082 = scalar_select %p2081, %s16, 1
      %s2083 = smul.addr %s2082, 32
      %s2084 = smul.addr %s2083, 8
      %s2085 = scalar_lea.vmem %s5, %s2084
      // Predicated region
      $region41: #{dense_layer.1} parent=39 // pred_check
        %p2086 = pneg %p144
      $region42: #{dense_layer.1} parent=39 // pred_check_branch
        %2088 = sbr.rel (%p2086) target = $region44
      $region43: #{dense_layer.1} parent=39 // pred_region
        _
      $region44: #{dense_layer.1} parent=39 // pred_fallthru
        _
    $region40: #{dense_layer.1} parent=5 // pred_fallthru
      _
    %p2089 = scmp.le.s32.totalorder 2, %s11
    // Predicated region
    $region45: #{dense_layer.1} parent=5 // pred_check
      %p2090 = pneg %p2089
    $region46: #{dense_layer.1} parent=5 // pred_check_branch
      %2092 = sbr.rel (%p2090) target = $region48
    $region47: #{dense_layer.1} parent=5 // pred_region
      %s2093 = ssub.s32 %s11, 2
      // Predicated region
      $region49: #{dense_layer.1} parent=47 // pred_check
        %p2094 = pneg %p150
      $region50: #{dense_layer.1} parent=47 // pred_check_branch
        %2096 = sbr.rel (%p2094) target = $region52
      $region51: #{dense_layer.1} parent=47 // pred_region
        %p2097 = scmp.lt.s32.totalorder %s17, 1
        %s2098 = scalar_select %p2097, %s17, 1
        %s2099 = smul.addr %s2098, 32
        %s2100 = smul.addr %s2099, 8
        %s2101 = scalar_lea.vmem %s5, %s2100
      $region52: #{dense_layer.1} parent=47 // pred_fallthru
        _
    $region48: #{dense_layer.1} parent=5 // pred_fallthru
      _
  $region6: #{dense_layer.1} parent=0 // loop_footer
    %s15 = sadd.s32 1, %s11
  $region7: #{dense_layer.1} parent=0 // loop_footer_branch
    %10 = sbr.rel target = $region3
  $region8: #{dense_layer.1} parent=0 // loop_exit
    _

</llo_original>
